<compile_context>
chip_gen: v7x
topology: tpu7x:2x2x1
jax: 0.10.0
libtpu: 0.0.40
codegen_flags: <defaults>
</compile_context>

<pallas_src>
import jax
import jax.numpy as jnp
from jax import lax
from jax.experimental import pallas as pl
from jax.experimental.pallas import tpu as pltpu

n_embd = 64
block_size = 32


def _make_head_kernel(bc, H, compute_dtype):
    """Build the kernel body for a fixed per-chunk batch size bc."""

    def kernel(x_ref, w_ref, o_ref):
        # x_ref block: (bb, T, C); w_ref: (C, 3H); o_ref block: (bb, T*H)
        bb, T, C = x_ref.shape
        n_chunks = bb // bc

        # Weight tile loaded once per grid step (tiny), already in compute dtype.
        w = w_ref[...]                                                   # (C, 3H)

        # Causal mask (T, T) built once per grid step, broadcast over bc below.
        row = lax.broadcasted_iota(jnp.int32, (T, T), 0)
        col = lax.broadcasted_iota(jnp.int32, (T, T), 1)
        causal = row >= col
        neg_inf = jnp.float32(-jnp.inf)

        def body(c, carry):
            r0 = pl.multiple_of(c * bc, bc)
            xc = x_ref[pl.ds(r0, bc), :, :]                              # (bc, T, C)

            # Fused k/q/v projection: one MXU matmul over bc*T rows.
            x2d = xc.reshape(bc * T, C).astype(compute_dtype)
            kqv = jnp.dot(x2d, w, preferred_element_type=jnp.float32)    # (bc*T, 3H)
            kqv = kqv.reshape(bc, T, 3 * H)
            k = kqv[:, :, 0:H]
            q = kqv[:, :, H:2 * H]      # C**-0.5 scale already folded into wq
            v = kqv[:, :, 2 * H:3 * H]

            # q @ k^T per batch, contracting the head dim (no explicit k.T).
            wei = jnp.einsum('bqh,bkh->bqk',
                             q.astype(compute_dtype), k.astype(compute_dtype),
                             preferred_element_type=jnp.float32)         # (bc, T, T)

            # Select-based causal mask (robust even if a row were fully masked).
            wei = jnp.where(causal[None, :, :], wei, neg_inf)

            # Numerically stable softmax in f32; exact reciprocal of the row
            # sum folded into the final output scale.
            wei = wei - jnp.max(wei, axis=-1, keepdims=True)
            p = jnp.exp(wei)
            inv_l = pl.reciprocal(jnp.sum(p, axis=-1, keepdims=True),
                                  approx=False)                          # (bc, T, 1)

            out = jnp.einsum('bqk,bkh->bqh',
                             p.astype(compute_dtype), v.astype(compute_dtype),
                             preferred_element_type=jnp.float32) * inv_l # (bc, T, H)

            # Lane-dense store: (bc, T*H) with T*H >= 128 -> unmasked vst.
            o_ref[pl.ds(r0, bc), :] = out.reshape(bc, T * H).astype(o_ref.dtype)
            return carry

        lax.fori_loop(0, n_chunks, body, 0, unroll=True)

    return kernel


def _choose_bb(B, *, bc=8, cap=128, min_steps=4):
    """Per-grid-step batch tile: a power-of-two multiple of bc, shrunk until
    the (padded) grid would have >= min_steps steps (or bb == bc)."""
    bb = cap
    while bb > bc and pl.cdiv(B, bb) < min_steps:
        bb //= 2
    return max(bb, bc)


def head_forward(x, wk, wq, wv, *, bb=None, bc=8, use_bf16=True):
    """x: (B, T, C) float32;  wk/wq/wv: (C, head_size) float32."""
    B, T, C = x.shape
    H = wk.shape[1]
    assert T <= block_size and C == n_embd

    compute_dtype = jnp.bfloat16 if use_bf16 else jnp.float32

    # Fuse the three projection weights into one (C, 3H) matrix (single weight
    # DMA / single MXU pass) and fold the module's C**-0.5 scale into wq.
    scale = jnp.asarray(C, jnp.float32) ** jnp.float32(-0.5)
    w_kqv = jnp.concatenate([wk, wq * scale, wv], axis=1).astype(compute_dtype)

    if bb is None:
        bb = _choose_bb(B, bc=bc)
    bb = max(bc, (bb // bc) * bc)       # bb must be a multiple of the chunk size

    # Pad B up to a multiple of bb (zero rows are computed then sliced off;
    # the causal diagonal keeps their softmax finite).
    Bp = pl.cdiv(B, bb) * bb
    if Bp != B:
        x = jnp.pad(x, ((0, Bp - B), (0, 0), (0, 0)))

    out2d = pl.pallas_call(
        _make_head_kernel(bc, H, compute_dtype),
        out_shape=jax.ShapeDtypeStruct((Bp, T * H), x.dtype),
        grid_spec=pltpu.PrefetchScalarGridSpec(
            num_scalar_prefetch=0,
            grid=(Bp // bb,),
            in_specs=[
                pl.BlockSpec((bb, T, C), lambda i: (i, 0, 0)),
                pl.BlockSpec((C, 3 * H), lambda i: (0, 0)),
            ],
            out_specs=pl.BlockSpec((bb, T * H), lambda i: (i, 0)),
        ),
        compiler_params=pltpu.CompilerParams(
            dimension_semantics=("parallel",),
            # Explicit headroomed budget (v7x: 64 MiB VMEM / 32 MiB scoped default).
            vmem_limit_bytes=24 * 1024 * 1024,
        ),
    )(x, w_kqv)

    return out2d[:B].reshape(B, T, H)


def head_reference(x, wk, wq, wv):
    """Pure-JAX reference mirroring the PyTorch forward exactly."""
    B, T, C = x.shape
    k = x @ wk
    q = x @ wq
    v = x @ wv
    wei = (q @ jnp.swapaxes(k, -2, -1)) * (C ** -0.5)
    tril = jnp.tril(jnp.ones((T, T), dtype=x.dtype))
    wei = jnp.where(tril == 0, -jnp.inf, wei)
    wei = jax.nn.softmax(wei, axis=-1)
    return wei @ v


if __name__ == "__main__":
    B, T, C = 2, 8, n_embd
    head_size = 16

    key = jax.random.PRNGKey(0)
    kx, kk, kq, kv = jax.random.split(key, 4)
    x = jax.random.normal(kx, (B, T, C), dtype=jnp.float32)
    # deterministic init, scaled like torch Linear default (~1/sqrt(fan_in))
    wk = jax.random.uniform(kk, (C, head_size), jnp.float32, -1.0, 1.0) / jnp.sqrt(C)
    wq = jax.random.uniform(kq, (C, head_size), jnp.float32, -1.0, 1.0) / jnp.sqrt(C)
    wv = jax.random.uniform(kv, (C, head_size), jnp.float32, -1.0, 1.0) / jnp.sqrt(C)

    ref = head_reference(x, wk, wq, wv)

    # Exact f32 MXU path: tight tolerance (parity with the PyTorch module).
    out_f32 = head_forward(x, wk, wq, wv, use_bf16=False)
    jax.block_until_ready(out_f32)
    assert out_f32.shape == (B, T, head_size)
    assert jnp.allclose(out_f32, ref, atol=1e-4, rtol=1e-4), \
        f"f32 max abs err = {jnp.max(jnp.abs(out_f32 - ref))}"

    # Default path: bf16 MXU operands (v6e/v7x feedback), f32 softmax/accum.
    out = head_forward(x, wk, wq, wv)
    jax.block_until_ready(out)
    assert out.shape == (B, T, head_size)
    assert jnp.allclose(out, ref, atol=2e-2, rtol=2e-2), \
        f"bf16 max abs err = {jnp.max(jnp.abs(out - ref))}"

    print("KERNEL_OK")
</pallas_src>

<mosaic_0001>
module attributes {stable_mosaic.version = 11 : i64} {
  func.func @kernel(%arg0: i32, %arg1: memref<8x8x64xf32, #tpu.memory_space<vmem>>, %arg2: memref<64x48xf32, #tpu.memory_space<vmem>>, %arg3: memref<8x128xf32, #tpu.memory_space<vmem>>) attributes {dimension_semantics = [#tpu.dimension_semantics<parallel>], iteration_bounds = array<i64: 1>, scalar_prefetch = 0 : i64, scratch_operands = 0 : i64, tpu.core_type = #tpu.core_type<tc>, window_params = [{transform_indices = @transform_0, window_bounds = array<i64: 8, 8, 64>}, {pipeline_mode = #tpu.pipeline_mode<synchronous>, transform_indices = @transform_1, window_bounds = array<i64: 64, 48>}, {transform_indices = @transform_2, window_bounds = array<i64: 8, 128>}]} {
    %c0 = arith.constant 0 : index
    %c0_0 = arith.constant 0 : index
    %0 = vector.load %arg2[%c0, %c0_0] : memref<64x48xf32, #tpu.memory_space<vmem>>, vector<64x48xf32>
    %1 = tpu.iota {dimensions = array<i32: 0>} : vector<8x8xi32>
    %2 = tpu.iota {dimensions = array<i32: 1>} : vector<8x8xi32>
    %3 = arith.cmpi sge, %1, %2 : vector<8x8xi32>
    %cst = arith.constant 0xFF800000 : f32
    %c0_i32 = arith.constant 0 : i32
    %c8_i32 = arith.constant 8 : i32
    %4 = arith.muli %c0_i32, %c8_i32 : i32
    %5 = tpu.assume_multiple %4, 8 : i32
    %6 = arith.index_cast %5 : i32 to index
    %c0_1 = arith.constant 0 : index
    %c0_2 = arith.constant 0 : index
    %7 = vector.load %arg1[%6, %c0_1, %c0_2] : memref<8x8x64xf32, #tpu.memory_space<vmem>>, vector<8x8x64xf32>
    %8 = vector.shape_cast %7 : vector<8x8x64xf32> to vector<64x64xf32>
    %cst_3 = arith.constant dense<0.000000e+00> : vector<64x48xf32>
    %9 = tpu.matmul %8, %0, %cst_3 {dimension_numbers = #tpu.dot_dimension_numbers<[1], [0], [0], [1], [0, 0, 1, 1], [], []>} : vector<64x64xf32>, vector<64x48xf32>, vector<64x48xf32> -> vector<64x48xf32>
    %10 = vector.shape_cast %9 : vector<64x48xf32> to vector<8x8x48xf32>
    %11 = vector.extract_strided_slice %10 {offsets = [0, 0, 0], sizes = [8, 8, 16], strides = [1, 1, 1]} : vector<8x8x48xf32> to vector<8x8x16xf32>
    %12 = vector.extract_strided_slice %10 {offsets = [0, 0, 16], sizes = [8, 8, 16], strides = [1, 1, 1]} : vector<8x8x48xf32> to vector<8x8x16xf32>
    %13 = vector.extract_strided_slice %10 {offsets = [0, 0, 32], sizes = [8, 8, 16], strides = [1, 1, 1]} : vector<8x8x48xf32> to vector<8x8x16xf32>
    "tpu.trace_start"() <{level = 10 : i32, message = "bqh,bkh->bqk"}> : () -> ()
    %cst_4 = arith.constant dense<0.000000e+00> : vector<8x8x8xf32>
    %14 = tpu.matmul %12, %11, %cst_4 {dimension_numbers = #tpu.dot_dimension_numbers<[2], [2], [1], [1], [0, 0, 0, 1, 1, 1], [0], [0]>} : vector<8x8x16xf32>, vector<8x8x16xf32>, vector<8x8x8xf32> -> vector<8x8x8xf32>
    "tpu.trace_stop"() : () -> ()
    %15 = vector.shape_cast %3 : vector<8x8xi1> to vector<1x8x8xi1>
    %16 = vector.shape_cast %15 : vector<1x8x8xi1> to vector<1x8x8xi1>
    %17 = vector.broadcast %16 : vector<1x8x8xi1> to vector<8x8x8xi1>
    %18 = vector.broadcast %cst : f32 to vector<8x8x8xf32>
    %19 = arith.select %17, %14, %18 : vector<8x8x8xi1>, vector<8x8x8xf32>
    %cst_5 = arith.constant dense<0xFF800000> : vector<8x8xf32>
    %20 = vector.multi_reduction <maximumf>, %19, %cst_5 [2] : vector<8x8x8xf32> to vector<8x8xf32>
    %21 = vector.shape_cast %20 : vector<8x8xf32> to vector<8x8x1xf32>
    %22 = vector.broadcast %21 : vector<8x8x1xf32> to vector<8x8x8xf32>
    %23 = arith.subf %19, %22 : vector<8x8x8xf32>
    %24 = math.exp %23 : vector<8x8x8xf32>
    %cst_6 = arith.constant dense<0.000000e+00> : vector<8x8xf32>
    %25 = vector.multi_reduction <add>, %24, %cst_6 [2] : vector<8x8x8xf32> to vector<8x8xf32>
    %26 = vector.shape_cast %25 : vector<8x8xf32> to vector<8x8x1xf32>
    %27 = tpu.reciprocal %26 : vector<8x8x1xf32> -> vector<8x8x1xf32>
    "tpu.trace_start"() <{level = 10 : i32, message = "bqk,bkh->bqh"}> : () -> ()
    %cst_7 = arith.constant dense<0.000000e+00> : vector<8x8x16xf32>
    %28 = tpu.matmul %24, %13, %cst_7 {dimension_numbers = #tpu.dot_dimension_numbers<[2], [1], [1], [2], [0, 0, 0, 1, 1, 2], [0], [0]>} : vector<8x8x8xf32>, vector<8x8x16xf32>, vector<8x8x16xf32> -> vector<8x8x16xf32>
    "tpu.trace_stop"() : () -> ()
    %29 = vector.broadcast %27 : vector<8x8x1xf32> to vector<8x8x16xf32>
    %30 = arith.mulf %28, %29 : vector<8x8x16xf32>
    %31 = vector.shape_cast %30 : vector<8x8x16xf32> to vector<8x128xf32>
    %32 = arith.index_cast %5 : i32 to index
    %c0_8 = arith.constant 0 : index
    %33 = vector.load %arg3[%32, %c0_8] : memref<8x128xf32, #tpu.memory_space<vmem>>, vector<8x128xf32>
    tpu.vector_store %arg3[%32, %c0_8], %31 {strides = array<i32>} : memref<8x128xf32, #tpu.memory_space<vmem>>, vector<8x128xf32>,
    %c1_i32 = arith.constant 1 : i32
    return
  }
  func.func @transform_0(%arg0: i32) -> (i32, i32, i32) {
    %c0_i32 = arith.constant 0 : i32
    %c0_i32_0 = arith.constant 0 : i32
    %c0_i32_1 = arith.constant 0 : i32
    return %arg0, %c0_i32, %c0_i32_0 : i32, i32, i32
  }
  func.func @transform_1(%arg0: i32) -> (i32, i32) {
    %c0_i32 = arith.constant 0 : i32
    %c0_i32_0 = arith.constant 0 : i32
    %c0_i32_1 = arith.constant 0 : i32
    return %c0_i32, %c0_i32_0 : i32, i32
  }
  func.func @transform_2(%arg0: i32) -> (i32, i32) {
    %c0_i32 = arith.constant 0 : i32
    %c0_i32_0 = arith.constant 0 : i32
    return %arg0, %c0_i32 : i32, i32
  }
}

</mosaic_0001>

<llo_original>
// kernel: tpu_custom_call.1
$region0: #{tpu_custom_call.1}
  #allocation0 [shape = 'u32[]', space=smem, size = 0x4, offset = 0x4, fixed_abs, tag = 'smem constant byte address 0x4 - core index']
  #allocation1 [shape = 'u32[144,128]{1,0:T(1,128)}', space=vmem, size = 0x12000, scoped, tag = 'internal scratch']
  %s0 = inlined_call_operand.vmem [shape: f32[8,8,64], index: 0, kind: input, shape index: {}]
  %s1 = inlined_call_operand.vmem [shape: f32[64,48], index: 1, kind: input, shape index: {}]
  %s2 = inlined_call_operand.hbm [shape: f32[8,128], index: 2, kind: output, shape index: {}]
  %s3 = sld [smem:[#allocation0]]
  $region18: #{tpu_custom_call.1} parent=0
    _
  %s5 = ssub.s32 1, %s3
  %s6 = scalar_select 0, %s5, %s3
  $region1: #{tpu_custom_call.1} parent=0
    #allocation2 [shape = 'u8[4096]{0}', space=vmem, size = 0x1000, scoped, tag = 'output window, operand 0, single buffered']
    #allocation3 [shape = 's32[1]{0}', space=sflag, size = 0x4, scoped, tag = 'scoped memory for tpu_custom_call.1']
    %7 = vsyncpa [#allocation3], 0
    // Predicated region
    $region2: #{tpu_custom_call.1} parent=1 // pred_check
      _
    $region3: #{tpu_custom_call.1} parent=1 // pred_check_branch
      %9 = sbr.rel (0) target = $region5
    $region4: #{tpu_custom_call.1} parent=1 // pred_region
      _
    $region5: #{tpu_custom_call.1} parent=1 // pred_fallthru
      _
    // Predicated region
    $region6: #{tpu_custom_call.1} parent=1 // pred_check
      _
    $region7: #{tpu_custom_call.1} parent=1 // pred_check_branch
      %11 = sbr.rel (0) target = $region9
    $region8: #{tpu_custom_call.1} parent=1 // pred_region
      _
    $region9: #{tpu_custom_call.1} parent=1 // pred_fallthru
      _
    %v12 = vld [vmem:[%s1] sm:$0xff]
    %v13 = vld [vmem:[%s1 + $0x8] sm:$0xff]
    %v14 = vld [vmem:[%s1 + $0x10] sm:$0xff]
    %v15 = vld [vmem:[%s1 + $0x18] sm:$0xff]
    %v16 = vld [vmem:[%s1 + $0x20] sm:$0xff]
    %v17 = vld [vmem:[%s1 + $0x28] sm:$0xff]
    %v18 = vld [vmem:[%s1 + $0x30] sm:$0xff]
    %v19 = vld [vmem:[%s1 + $0x38] sm:$0xff]
    %v20 = vlaneseq
    %v21 = vshrl.u32 %v20, 7
    %v22 = vlaneseq
    %v23 = vand.u32 %v22, 127
    %vm24 = vcmp.ge.s32.totalorder %v21, %v23
    %s25 = smul.u32 0, 8
    %s26 = scalar_lea.vmem %s0, %s25
    %v27 = vld [vmem:[%s26] sm:$0xff]
    %v28 = vld [vmem:[%s26 + $0x8] sm:$0xff]
    %v29 = vld [vmem:[%s26 + $0x10] sm:$0xff]
    %v30 = vld [vmem:[%s26 + $0x18] sm:$0xff]
    %v31 = vld [vmem:[%s26 + $0x20] sm:$0xff]
    %v32 = vld [vmem:[%s26 + $0x28] sm:$0xff]
    %v33 = vld [vmem:[%s26 + $0x30] sm:$0xff]
    %v34 = vld [vmem:[%s26 + $0x38] sm:$0xff]
    %vm35 = vcmask 523264
    %v37 = vsel %vm35, %v27, 0
    %v40 = vsel %vm35, %v28, 0
    %v43 = vsel %vm35, %v29, 0
    %v46 = vsel %vm35, %v30, 0
    %v49 = vsel %vm35, %v31, 0
    %v52 = vsel %vm35, %v32, 0
    %v55 = vsel %vm35, %v33, 0
    %v58 = vsel %vm35, %v34, 0
    %60 = vmatprep.subr.mxu0 0.0
    %61 = vmatpush1.msra.mxu0 %v12
    %62 = vmatprep.subr.mxu0 0.0
    %63 = vmatpush1.msra.mxu0 %v13
    %64 = vmatprep.subr.mxu0 0.0
    %65 = vmatpush1.msra.mxu0 %v14
    %66 = vmatprep.subr.mxu0 0.0
    %67 = vmatpush1.msra.mxu0 %v15
    %68 = vmatprep.subr.mxu0 0.0
    %69 = vmatpush1.msra.mxu0 %v16
    %70 = vmatprep.subr.mxu0 0.0
    %71 = vmatpush1.msra.mxu0 %v17
    %72 = vmatprep.subr.mxu0 0.0
    %73 = vmatpush1.msra.mxu0 %v18
    %74 = vmatprep.subr.mxu0 0.0
    %75 = vmatpush1.msra.mxu0 %v19
    %76 = vmatprep.subr.mxu0 0.0
    %77 = vmatpush1.msra.mxu0 0.0
    %78 = vmatprep.subr.mxu0 0.0
    %79 = vmatpush1.msra.mxu0 0.0
    %80 = vmatprep.subr.mxu0 0.0
    %81 = vmatpush1.msra.mxu0 0.0
    %82 = vmatprep.subr.mxu0 0.0
    %83 = vmatpush1.msra.mxu0 0.0
    %84 = vmatprep.subr.mxu0 0.0
    %85 = vmatpush1.msra.mxu0 0.0
    %86 = vmatprep.subr.mxu0 0.0
    %87 = vmatpush1.msra.mxu0 0.0
    %88 = vmatprep.subr.mxu0 0.0
    %89 = vmatpush1.msra.mxu0 0.0
    %90 = vmatprep.subr.mxu0 0.0
    %91 = vmatpush1.msra.mxu0 0.0
    %92 = vmatprep.subr.mxu0 0.0
    %93 = vmatpush1.msra.mxu0 0.0
    %94 = vmatprep.subr.mxu0 0.0
    %95 = vmatpush1.msra.mxu0 0.0
    %96 = vmatprep.subr.mxu0 0.0
    %97 = vmatpush1.msra.mxu0 0.0
    %98 = vmatprep.subr.mxu0 0.0
    %99 = vmatpush1.msra.mxu0 0.0
    %100 = vmatprep.subr.mxu0 0.0
    %101 = vmatpush1.msra.mxu0 0.0
    %102 = vmatprep.subr.mxu0 0.0
    %103 = vmatpush1.msra.mxu0 0.0
    %104 = vmatprep.subr.mxu0 0.0
    %105 = vmatpush1.msra.mxu0 0.0
    %106 = vmatprep.subr.mxu0 0.0
    %107 = vmatpush1.msra.mxu0 0.0
    %108 = vmatprep.subr.mxu0 0.0
    %109 = vmatpush1.msra.mxu0 0.0
    %110 = vmatprep.subr.mxu0 0.0
    %111 = vmatpush1.msra.mxu0 0.0
    %112 = vmatprep.subr.mxu0 0.0
    %113 = vmatpush1.msra.mxu0 0.0
    %114 = vmatprep.subr.mxu0 0.0
    %115 = vmatpush1.msra.mxu0 0.0
    %116 = vmatprep.subr.mxu0 0.0
    %117 = vmatpush1.msra.mxu0 0.0
    %118 = vmatprep.subr.mxu0 0.0
    %119 = vmatpush1.msra.mxu0 0.0
    %120 = vmatprep.subr.mxu0 0.0
    %121 = vmatpush1.msra.mxu0 0.0
    %122 = vmatprep.subr.mxu0 0.0
    %123 = vmatpush1.msra.mxu0 0.0
    %124 = vmatprep.mubr.f32.mxu0 0.0
    %125 = vmatmul.mubr.f32.gmra.mrb[0].mxu0 %v37
    %v126 = vpop.f32.mrb[0].mxu0
    %v127 = vadd.f32 0.0, %v126
    %v128 = vpop.f32.mrb[0].mxu0
    %129 = vmatprep.mubr.f32.mxu0 0.0
    %130 = vmatmul.mubr.f32.gmra.mrb[0].mxu0 %v40
    %v131 = vpop.f32.mrb[0].mxu0
    %v132 = vadd.f32 0.0, %v131
    %v133 = vpop.f32.mrb[0].mxu0
    %134 = vmatprep.mubr.f32.mxu0 0.0
    %135 = vmatmul.mubr.f32.gmra.mrb[0].mxu0 %v43
    %v136 = vpop.f32.mrb[0].mxu0
    %v137 = vadd.f32 0.0, %v136
    %v138 = vpop.f32.mrb[0].mxu0
    %139 = vmatprep.mubr.f32.mxu0 0.0
    %140 = vmatmul.mubr.f32.gmra.mrb[0].mxu0 %v46
    %v141 = vpop.f32.mrb[0].mxu0
    %v142 = vadd.f32 0.0, %v141
    %v143 = vpop.f32.mrb[0].mxu0
    %144 = vmatprep.mubr.f32.mxu0 0.0
    %145 = vmatmul.mubr.f32.gmra.mrb[0].mxu0 %v49
    %v146 = vpop.f32.mrb[0].mxu0
    %v147 = vadd.f32 0.0, %v146
    %v148 = vpop.f32.mrb[0].mxu0
    %149 = vmatprep.mubr.f32.mxu0 0.0
    %150 = vmatmul.mubr.f32.gmra.mrb[0].mxu0 %v52
    %v151 = vpop.f32.mrb[0].mxu0
    %v152 = vadd.f32 0.0, %v151
    %v153 = vpop.f32.mrb[0].mxu0
    %154 = vmatprep.mubr.f32.mxu0 0.0
    %155 = vmatmul.mubr.f32.gmra.mrb[0].mxu0 %v55
    %v156 = vpop.f32.mrb[0].mxu0
    %v157 = vadd.f32 0.0, %v156
    %v158 = vpop.f32.mrb[0].mxu0
    %159 = vmatprep.mubr.f32.mxu0 0.0
    %160 = vmatmul.mubr.f32.gmra.mrb[0].mxu0 %v58
    %v161 = vpop.f32.mrb[0].mxu0
    %v162 = vadd.f32 0.0, %v161
    %v163 = vpop.f32.mrb[0].mxu0
    %164 = vdwg.mxu0
    %166 = vrot.lane.b32.xlu0 %v127, 112
    %v167 = vpop.permute.xlu0 %166
    %vm168 = vcmask 130048
    %v169 = vsel %vm168, %v167, 0
    %v171 = vsel %vm168, %v127, 0
    %173 = vmatprep.subr.mxu0 0.0
    %174 = vmatpush1.xpose.msra.mxu0 %v171
    %175 = vmatprep.subr.mxu0 0.0
    %176 = vmatpush1.xpose.msra.mxu0 0.0
    %177 = vmatprep.subr.mxu0 0.0
    %178 = vmatpush1.xpose.msra.mxu0 0.0
    %179 = vmatprep.subr.mxu0 0.0
    %180 = vmatpush1.xpose.msra.mxu0 0.0
    %181 = vmatprep.subr.mxu0 0.0
    %182 = vmatpush1.xpose.msra.mxu0 0.0
    %183 = vmatprep.subr.mxu0 0.0
    %184 = vmatpush1.xpose.msra.mxu0 0.0
    %185 = vmatprep.subr.mxu0 0.0
    %186 = vmatpush1.xpose.msra.mxu0 0.0
    %187 = vmatprep.subr.mxu0 0.0
    %188 = vmatpush1.xpose.msra.mxu0 0.0
    %189 = vmatprep.subr.mxu0 0.0
    %190 = vmatpush1.xpose.msra.mxu0 0.0
    %191 = vmatprep.subr.mxu0 0.0
    %192 = vmatpush1.xpose.msra.mxu0 0.0
    %193 = vmatprep.subr.mxu0 0.0
    %194 = vmatpush1.xpose.msra.mxu0 0.0
    %195 = vmatprep.subr.mxu0 0.0
    %196 = vmatpush1.xpose.msra.mxu0 0.0
    %197 = vmatprep.subr.mxu0 0.0
    %198 = vmatpush1.xpose.msra.mxu0 0.0
    %199 = vmatprep.subr.mxu0 0.0
    %200 = vmatpush1.xpose.msra.mxu0 0.0
    %201 = vmatprep.subr.mxu0 0.0
    %202 = vmatpush1.xpose.msra.mxu0 0.0
    %203 = vmatprep.subr.mxu0 0.0
    %204 = vmatpush1.xpose.msra.mxu0 0.0
    %205 = vmatprep.subr.mxu0 0.0
    %206 = vmatpush1.xpose.msra.mxu0 0.0
    %207 = vmatprep.subr.mxu0 0.0
    %208 = vmatpush1.xpose.msra.mxu0 0.0
    %209 = vmatprep.subr.mxu0 0.0
    %210 = vmatpush1.xpose.msra.mxu0 0.0
    %211 = vmatprep.subr.mxu0 0.0
    %212 = vmatpush1.xpose.msra.mxu0 0.0
    %213 = vmatprep.subr.mxu0 0.0
    %214 = vmatpush1.xpose.msra.mxu0 0.0
    %215 = vmatprep.subr.mxu0 0.0
    %216 = vmatpush1.xpose.msra.mxu0 0.0
    %217 = vmatprep.subr.mxu0 0.0
    %218 = vmatpush1.xpose.msra.mxu0 0.0
    %219 = vmatprep.subr.mxu0 0.0
    %220 = vmatpush1.xpose.msra.mxu0 0.0
    %221 = vmatprep.subr.mxu0 0.0
    %222 = vmatpush1.xpose.msra.mxu0 0.0
    %223 = vmatprep.subr.mxu0 0.0
    %224 = vmatpush1.xpose.msra.mxu0 0.0
    %225 = vmatprep.subr.mxu0 0.0
    %226 = vmatpush1.xpose.msra.mxu0 0.0
    %227 = vmatprep.subr.mxu0 0.0
    %228 = vmatpush1.xpose.msra.mxu0 0.0
    %229 = vmatprep.subr.mxu0 0.0
    %230 = vmatpush1.xpose.msra.mxu0 0.0
    %231 = vmatprep.subr.mxu0 0.0
    %232 = vmatpush1.xpose.msra.mxu0 0.0
    %233 = vmatprep.subr.mxu0 0.0
    %234 = vmatpush1.xpose.msra.mxu0 0.0
    %235 = vmatprep.subr.mxu0 0.0
    %236 = vmatpush1.xpose.msra.mxu0 0.0
    %237 = vmatprep.mubr.f32.mxu0 0.0
    %238 = vmatmul.mubr.f32.gmra.mrb[0].mxu0 %v169
    %v239 = vpop.f32.mrb[0].mxu0
    %v240 = vadd.f32 0.0, %v239
    %v241 = vpop.f32.mrb[0].mxu0
    %242 = vdwg.mxu0
    %244 = vrot.lane.b32.xlu0 %v132, 112
    %v245 = vpop.permute.xlu0 %244
    %v246 = vsel %vm168, %v245, 0
    %v248 = vsel %vm168, %v132, 0
    %250 = vmatprep.subr.mxu0 0.0
    %251 = vmatpush1.xpose.msra.mxu0 %v248
    %252 = vmatprep.subr.mxu0 0.0
    %253 = vmatpush1.xpose.msra.mxu0 0.0
    %254 = vmatprep.subr.mxu0 0.0
    %255 = vmatpush1.xpose.msra.mxu0 0.0
    %256 = vmatprep.subr.mxu0 0.0
    %257 = vmatpush1.xpose.msra.mxu0 0.0
    %258 = vmatprep.subr.mxu0 0.0
    %259 = vmatpush1.xpose.msra.mxu0 0.0
    %260 = vmatprep.subr.mxu0 0.0
    %261 = vmatpush1.xpose.msra.mxu0 0.0
    %262 = vmatprep.subr.mxu0 0.0
    %263 = vmatpush1.xpose.msra.mxu0 0.0
    %264 = vmatprep.subr.mxu0 0.0
    %265 = vmatpush1.xpose.msra.mxu0 0.0
    %266 = vmatprep.subr.mxu0 0.0
    %267 = vmatpush1.xpose.msra.mxu0 0.0
    %268 = vmatprep.subr.mxu0 0.0
    %269 = vmatpush1.xpose.msra.mxu0 0.0
    %270 = vmatprep.subr.mxu0 0.0
    %271 = vmatpush1.xpose.msra.mxu0 0.0
    %272 = vmatprep.subr.mxu0 0.0
    %273 = vmatpush1.xpose.msra.mxu0 0.0
    %274 = vmatprep.subr.mxu0 0.0
    %275 = vmatpush1.xpose.msra.mxu0 0.0
    %276 = vmatprep.subr.mxu0 0.0
    %277 = vmatpush1.xpose.msra.mxu0 0.0
    %278 = vmatprep.subr.mxu0 0.0
    %279 = vmatpush1.xpose.msra.mxu0 0.0
    %280 = vmatprep.subr.mxu0 0.0
    %281 = vmatpush1.xpose.msra.mxu0 0.0
    %282 = vmatprep.subr.mxu0 0.0
    %283 = vmatpush1.xpose.msra.mxu0 0.0
    %284 = vmatprep.subr.mxu0 0.0
    %285 = vmatpush1.xpose.msra.mxu0 0.0
    %286 = vmatprep.subr.mxu0 0.0
    %287 = vmatpush1.xpose.msra.mxu0 0.0
    %288 = vmatprep.subr.mxu0 0.0
    %289 = vmatpush1.xpose.msra.mxu0 0.0
    %290 = vmatprep.subr.mxu0 0.0
    %291 = vmatpush1.xpose.msra.mxu0 0.0
    %292 = vmatprep.subr.mxu0 0.0
    %293 = vmatpush1.xpose.msra.mxu0 0.0
    %294 = vmatprep.subr.mxu0 0.0
    %295 = vmatpush1.xpose.msra.mxu0 0.0
    %296 = vmatprep.subr.mxu0 0.0
    %297 = vmatpush1.xpose.msra.mxu0 0.0
    %298 = vmatprep.subr.mxu0 0.0
    %299 = vmatpush1.xpose.msra.mxu0 0.0
    %300 = vmatprep.subr.mxu0 0.0
    %301 = vmatpush1.xpose.msra.mxu0 0.0
    %302 = vmatprep.subr.mxu0 0.0
    %303 = vmatpush1.xpose.msra.mxu0 0.0
    %304 = vmatprep.subr.mxu0 0.0
    %305 = vmatpush1.xpose.msra.mxu0 0.0
    %306 = vmatprep.subr.mxu0 0.0
    %307 = vmatpush1.xpose.msra.mxu0 0.0
    %308 = vmatprep.subr.mxu0 0.0
    %309 = vmatpush1.xpose.msra.mxu0 0.0
    %310 = vmatprep.subr.mxu0 0.0
    %311 = vmatpush1.xpose.msra.mxu0 0.0
    %312 = vmatprep.subr.mxu0 0.0
    %313 = vmatpush1.xpose.msra.mxu0 0.0
    %314 = vmatprep.mubr.f32.mxu0 0.0
    %315 = vmatmul.mubr.f32.gmra.mrb[0].mxu0 %v246
    %v316 = vpop.f32.mrb[0].mxu0
    %v317 = vadd.f32 0.0, %v316
    %v318 = vpop.f32.mrb[0].mxu0
    %319 = vdwg.mxu0
    %321 = vrot.lane.b32.xlu0 %v137, 112
    %v322 = vpop.permute.xlu0 %321
    %v323 = vsel %vm168, %v322, 0
    %v325 = vsel %vm168, %v137, 0
    %327 = vmatprep.subr.mxu0 0.0
    %328 = vmatpush1.xpose.msra.mxu0 %v325
    %329 = vmatprep.subr.mxu0 0.0
    %330 = vmatpush1.xpose.msra.mxu0 0.0
    %331 = vmatprep.subr.mxu0 0.0
    %332 = vmatpush1.xpose.msra.mxu0 0.0
    %333 = vmatprep.subr.mxu0 0.0
    %334 = vmatpush1.xpose.msra.mxu0 0.0
    %335 = vmatprep.subr.mxu0 0.0
    %336 = vmatpush1.xpose.msra.mxu0 0.0
    %337 = vmatprep.subr.mxu0 0.0
    %338 = vmatpush1.xpose.msra.mxu0 0.0
    %339 = vmatprep.subr.mxu0 0.0
    %340 = vmatpush1.xpose.msra.mxu0 0.0
    %341 = vmatprep.subr.mxu0 0.0
    %342 = vmatpush1.xpose.msra.mxu0 0.0
    %343 = vmatprep.subr.mxu0 0.0
    %344 = vmatpush1.xpose.msra.mxu0 0.0
    %345 = vmatprep.subr.mxu0 0.0
    %346 = vmatpush1.xpose.msra.mxu0 0.0
    %347 = vmatprep.subr.mxu0 0.0
    %348 = vmatpush1.xpose.msra.mxu0 0.0
    %349 = vmatprep.subr.mxu0 0.0
    %350 = vmatpush1.xpose.msra.mxu0 0.0
    %351 = vmatprep.subr.mxu0 0.0
    %352 = vmatpush1.xpose.msra.mxu0 0.0
    %353 = vmatprep.subr.mxu0 0.0
    %354 = vmatpush1.xpose.msra.mxu0 0.0
    %355 = vmatprep.subr.mxu0 0.0
    %356 = vmatpush1.xpose.msra.mxu0 0.0
    %357 = vmatprep.subr.mxu0 0.0
    %358 = vmatpush1.xpose.msra.mxu0 0.0
    %359 = vmatprep.subr.mxu0 0.0
    %360 = vmatpush1.xpose.msra.mxu0 0.0
    %361 = vmatprep.subr.mxu0 0.0
    %362 = vmatpush1.xpose.msra.mxu0 0.0
    %363 = vmatprep.subr.mxu0 0.0
    %364 = vmatpush1.xpose.msra.mxu0 0.0
    %365 = vmatprep.subr.mxu0 0.0
    %366 = vmatpush1.xpose.msra.mxu0 0.0
    %367 = vmatprep.subr.mxu0 0.0
    %368 = vmatpush1.xpose.msra.mxu0 0.0
    %369 = vmatprep.subr.mxu0 0.0
    %370 = vmatpush1.xpose.msra.mxu0 0.0
    %371 = vmatprep.subr.mxu0 0.0
    %372 = vmatpush1.xpose.msra.mxu0 0.0
    %373 = vmatprep.subr.mxu0 0.0
    %374 = vmatpush1.xpose.msra.mxu0 0.0
    %375 = vmatprep.subr.mxu0 0.0
    %376 = vmatpush1.xpose.msra.mxu0 0.0
    %377 = vmatprep.subr.mxu0 0.0
    %378 = vmatpush1.xpose.msra.mxu0 0.0
    %379 = vmatprep.subr.mxu0 0.0
    %380 = vmatpush1.xpose.msra.mxu0 0.0
    %381 = vmatprep.subr.mxu0 0.0
    %382 = vmatpush1.xpose.msra.mxu0 0.0
    %383 = vmatprep.subr.mxu0 0.0
    %384 = vmatpush1.xpose.msra.mxu0 0.0
    %385 = vmatprep.subr.mxu0 0.0
    %386 = vmatpush1.xpose.msra.mxu0 0.0
    %387 = vmatprep.subr.mxu0 0.0
    %388 = vmatpush1.xpose.msra.mxu0 0.0
    %389 = vmatprep.subr.mxu0 0.0
    %390 = vmatpush1.xpose.msra.mxu0 0.0
    %391 = vmatprep.mubr.f32.mxu0 0.0
    %392 = vmatmul.mubr.f32.gmra.mrb[0].mxu0 %v323
    %v393 = vpop.f32.mrb[0].mxu0
    %v394 = vadd.f32 0.0, %v393
    %v395 = vpop.f32.mrb[0].mxu0
    %396 = vdwg.mxu0
    %398 = vrot.lane.b32.xlu0 %v142, 112
    %v399 = vpop.permute.xlu0 %398
    %v400 = vsel %vm168, %v399, 0
    %v402 = vsel %vm168, %v142, 0
    %404 = vmatprep.subr.mxu0 0.0
    %405 = vmatpush1.xpose.msra.mxu0 %v402
    %406 = vmatprep.subr.mxu0 0.0
    %407 = vmatpush1.xpose.msra.mxu0 0.0
    %408 = vmatprep.subr.mxu0 0.0
    %409 = vmatpush1.xpose.msra.mxu0 0.0
    %410 = vmatprep.subr.mxu0 0.0
    %411 = vmatpush1.xpose.msra.mxu0 0.0
    %412 = vmatprep.subr.mxu0 0.0
    %413 = vmatpush1.xpose.msra.mxu0 0.0
    %414 = vmatprep.subr.mxu0 0.0
    %415 = vmatpush1.xpose.msra.mxu0 0.0
    %416 = vmatprep.subr.mxu0 0.0
    %417 = vmatpush1.xpose.msra.mxu0 0.0
    %418 = vmatprep.subr.mxu0 0.0
    %419 = vmatpush1.xpose.msra.mxu0 0.0
    %420 = vmatprep.subr.mxu0 0.0
    %421 = vmatpush1.xpose.msra.mxu0 0.0
    %422 = vmatprep.subr.mxu0 0.0
    %423 = vmatpush1.xpose.msra.mxu0 0.0
    %424 = vmatprep.subr.mxu0 0.0
    %425 = vmatpush1.xpose.msra.mxu0 0.0
    %426 = vmatprep.subr.mxu0 0.0
    %427 = vmatpush1.xpose.msra.mxu0 0.0
    %428 = vmatprep.subr.mxu0 0.0
    %429 = vmatpush1.xpose.msra.mxu0 0.0
    %430 = vmatprep.subr.mxu0 0.0
    %431 = vmatpush1.xpose.msra.mxu0 0.0
    %432 = vmatprep.subr.mxu0 0.0
    %433 = vmatpush1.xpose.msra.mxu0 0.0
    %434 = vmatprep.subr.mxu0 0.0
    %435 = vmatpush1.xpose.msra.mxu0 0.0
    %436 = vmatprep.subr.mxu0 0.0
    %437 = vmatpush1.xpose.msra.mxu0 0.0
    %438 = vmatprep.subr.mxu0 0.0
    %439 = vmatpush1.xpose.msra.mxu0 0.0
    %440 = vmatprep.subr.mxu0 0.0
    %441 = vmatpush1.xpose.msra.mxu0 0.0
    %442 = vmatprep.subr.mxu0 0.0
    %443 = vmatpush1.xpose.msra.mxu0 0.0
    %444 = vmatprep.subr.mxu0 0.0
    %445 = vmatpush1.xpose.msra.mxu0 0.0
    %446 = vmatprep.subr.mxu0 0.0
    %447 = vmatpush1.xpose.msra.mxu0 0.0
    %448 = vmatprep.subr.mxu0 0.0
    %449 = vmatpush1.xpose.msra.mxu0 0.0
    %450 = vmatprep.subr.mxu0 0.0
    %451 = vmatpush1.xpose.msra.mxu0 0.0
    %452 = vmatprep.subr.mxu0 0.0
    %453 = vmatpush1.xpose.msra.mxu0 0.0
    %454 = vmatprep.subr.mxu0 0.0
    %455 = vmatpush1.xpose.msra.mxu0 0.0
    %456 = vmatprep.subr.mxu0 0.0
    %457 = vmatpush1.xpose.msra.mxu0 0.0
    %458 = vmatprep.subr.mxu0 0.0
    %459 = vmatpush1.xpose.msra.mxu0 0.0
    %460 = vmatprep.subr.mxu0 0.0
    %461 = vmatpush1.xpose.msra.mxu0 0.0
    %462 = vmatprep.subr.mxu0 0.0
    %463 = vmatpush1.xpose.msra.mxu0 0.0
    %464 = vmatprep.subr.mxu0 0.0
    %465 = vmatpush1.xpose.msra.mxu0 0.0
    %466 = vmatprep.subr.mxu0 0.0
    %467 = vmatpush1.xpose.msra.mxu0 0.0
    %468 = vmatprep.mubr.f32.mxu0 0.0
    %469 = vmatmul.mubr.f32.gmra.mrb[0].mxu0 %v400
    %v470 = vpop.f32.mrb[0].mxu0
    %v471 = vadd.f32 0.0, %v470
    %v472 = vpop.f32.mrb[0].mxu0
    %473 = vdwg.mxu0
    %475 = vrot.lane.b32.xlu0 %v147, 112
    %v476 = vpop.permute.xlu0 %475
    %v477 = vsel %vm168, %v476, 0
    %v479 = vsel %vm168, %v147, 0
    %481 = vmatprep.subr.mxu0 0.0
    %482 = vmatpush1.xpose.msra.mxu0 %v479
    %483 = vmatprep.subr.mxu0 0.0
    %484 = vmatpush1.xpose.msra.mxu0 0.0
    %485 = vmatprep.subr.mxu0 0.0
    %486 = vmatpush1.xpose.msra.mxu0 0.0
    %487 = vmatprep.subr.mxu0 0.0
    %488 = vmatpush1.xpose.msra.mxu0 0.0
    %489 = vmatprep.subr.mxu0 0.0
    %490 = vmatpush1.xpose.msra.mxu0 0.0
    %491 = vmatprep.subr.mxu0 0.0
    %492 = vmatpush1.xpose.msra.mxu0 0.0
    %493 = vmatprep.subr.mxu0 0.0
    %494 = vmatpush1.xpose.msra.mxu0 0.0
    %495 = vmatprep.subr.mxu0 0.0
    %496 = vmatpush1.xpose.msra.mxu0 0.0
    %497 = vmatprep.subr.mxu0 0.0
    %498 = vmatpush1.xpose.msra.mxu0 0.0
    %499 = vmatprep.subr.mxu0 0.0
    %500 = vmatpush1.xpose.msra.mxu0 0.0
    %501 = vmatprep.subr.mxu0 0.0
    %502 = vmatpush1.xpose.msra.mxu0 0.0
    %503 = vmatprep.subr.mxu0 0.0
    %504 = vmatpush1.xpose.msra.mxu0 0.0
    %505 = vmatprep.subr.mxu0 0.0
    %506 = vmatpush1.xpose.msra.mxu0 0.0
    %507 = vmatprep.subr.mxu0 0.0
    %508 = vmatpush1.xpose.msra.mxu0 0.0
    %509 = vmatprep.subr.mxu0 0.0
    %510 = vmatpush1.xpose.msra.mxu0 0.0
    %511 = vmatprep.subr.mxu0 0.0
    %512 = vmatpush1.xpose.msra.mxu0 0.0
    %513 = vmatprep.subr.mxu0 0.0
    %514 = vmatpush1.xpose.msra.mxu0 0.0
    %515 = vmatprep.subr.mxu0 0.0
    %516 = vmatpush1.xpose.msra.mxu0 0.0
    %517 = vmatprep.subr.mxu0 0.0
    %518 = vmatpush1.xpose.msra.mxu0 0.0
    %519 = vmatprep.subr.mxu0 0.0
    %520 = vmatpush1.xpose.msra.mxu0 0.0
    %521 = vmatprep.subr.mxu0 0.0
    %522 = vmatpush1.xpose.msra.mxu0 0.0
    %523 = vmatprep.subr.mxu0 0.0
    %524 = vmatpush1.xpose.msra.mxu0 0.0
    %525 = vmatprep.subr.mxu0 0.0
    %526 = vmatpush1.xpose.msra.mxu0 0.0
    %527 = vmatprep.subr.mxu0 0.0
    %528 = vmatpush1.xpose.msra.mxu0 0.0
    %529 = vmatprep.subr.mxu0 0.0
    %530 = vmatpush1.xpose.msra.mxu0 0.0
    %531 = vmatprep.subr.mxu0 0.0
    %532 = vmatpush1.xpose.msra.mxu0 0.0
    %533 = vmatprep.subr.mxu0 0.0
    %534 = vmatpush1.xpose.msra.mxu0 0.0
    %535 = vmatprep.subr.mxu0 0.0
    %536 = vmatpush1.xpose.msra.mxu0 0.0
    %537 = vmatprep.subr.mxu0 0.0
    %538 = vmatpush1.xpose.msra.mxu0 0.0
    %539 = vmatprep.subr.mxu0 0.0
    %540 = vmatpush1.xpose.msra.mxu0 0.0
    %541 = vmatprep.subr.mxu0 0.0
    %542 = vmatpush1.xpose.msra.mxu0 0.0
    %543 = vmatprep.subr.mxu0 0.0
    %544 = vmatpush1.xpose.msra.mxu0 0.0
    %545 = vmatprep.mubr.f32.mxu0 0.0
    %546 = vmatmul.mubr.f32.gmra.mrb[0].mxu0 %v477
    %v547 = vpop.f32.mrb[0].mxu0
    %v548 = vadd.f32 0.0, %v547
    %v549 = vpop.f32.mrb[0].mxu0
    %550 = vdwg.mxu0
    %552 = vrot.lane.b32.xlu0 %v152, 112
    %v553 = vpop.permute.xlu0 %552
    %v554 = vsel %vm168, %v553, 0
    %v556 = vsel %vm168, %v152, 0
    %558 = vmatprep.subr.mxu0 0.0
    %559 = vmatpush1.xpose.msra.mxu0 %v556
    %560 = vmatprep.subr.mxu0 0.0
    %561 = vmatpush1.xpose.msra.mxu0 0.0
    %562 = vmatprep.subr.mxu0 0.0
    %563 = vmatpush1.xpose.msra.mxu0 0.0
    %564 = vmatprep.subr.mxu0 0.0
    %565 = vmatpush1.xpose.msra.mxu0 0.0
    %566 = vmatprep.subr.mxu0 0.0
    %567 = vmatpush1.xpose.msra.mxu0 0.0
    %568 = vmatprep.subr.mxu0 0.0
    %569 = vmatpush1.xpose.msra.mxu0 0.0
    %570 = vmatprep.subr.mxu0 0.0
    %571 = vmatpush1.xpose.msra.mxu0 0.0
    %572 = vmatprep.subr.mxu0 0.0
    %573 = vmatpush1.xpose.msra.mxu0 0.0
    %574 = vmatprep.subr.mxu0 0.0
    %575 = vmatpush1.xpose.msra.mxu0 0.0
    %576 = vmatprep.subr.mxu0 0.0
    %577 = vmatpush1.xpose.msra.mxu0 0.0
    %578 = vmatprep.subr.mxu0 0.0
    %579 = vmatpush1.xpose.msra.mxu0 0.0
    %580 = vmatprep.subr.mxu0 0.0
    %581 = vmatpush1.xpose.msra.mxu0 0.0
    %582 = vmatprep.subr.mxu0 0.0
    %583 = vmatpush1.xpose.msra.mxu0 0.0
    %584 = vmatprep.subr.mxu0 0.0
    %585 = vmatpush1.xpose.msra.mxu0 0.0
    %586 = vmatprep.subr.mxu0 0.0
    %587 = vmatpush1.xpose.msra.mxu0 0.0
    %588 = vmatprep.subr.mxu0 0.0
    %589 = vmatpush1.xpose.msra.mxu0 0.0
    %590 = vmatprep.subr.mxu0 0.0
    %591 = vmatpush1.xpose.msra.mxu0 0.0
    %592 = vmatprep.subr.mxu0 0.0
    %593 = vmatpush1.xpose.msra.mxu0 0.0
    %594 = vmatprep.subr.mxu0 0.0
    %595 = vmatpush1.xpose.msra.mxu0 0.0
    %596 = vmatprep.subr.mxu0 0.0
    %597 = vmatpush1.xpose.msra.mxu0 0.0
    %598 = vmatprep.subr.mxu0 0.0
    %599 = vmatpush1.xpose.msra.mxu0 0.0
    %600 = vmatprep.subr.mxu0 0.0
    %601 = vmatpush1.xpose.msra.mxu0 0.0
    %602 = vmatprep.subr.mxu0 0.0
    %603 = vmatpush1.xpose.msra.mxu0 0.0
    %604 = vmatprep.subr.mxu0 0.0
    %605 = vmatpush1.xpose.msra.mxu0 0.0
    %606 = vmatprep.subr.mxu0 0.0
    %607 = vmatpush1.xpose.msra.mxu0 0.0
    %608 = vmatprep.subr.mxu0 0.0
    %609 = vmatpush1.xpose.msra.mxu0 0.0
    %610 = vmatprep.subr.mxu0 0.0
    %611 = vmatpush1.xpose.msra.mxu0 0.0
    %612 = vmatprep.subr.mxu0 0.0
    %613 = vmatpush1.xpose.msra.mxu0 0.0
    %614 = vmatprep.subr.mxu0 0.0
    %615 = vmatpush1.xpose.msra.mxu0 0.0
    %616 = vmatprep.subr.mxu0 0.0
    %617 = vmatpush1.xpose.msra.mxu0 0.0
    %618 = vmatprep.subr.mxu0 0.0
    %619 = vmatpush1.xpose.msra.mxu0 0.0
    %620 = vmatprep.subr.mxu0 0.0
    %621 = vmatpush1.xpose.msra.mxu0 0.0
    %622 = vmatprep.mubr.f32.mxu0 0.0
    %623 = vmatmul.mubr.f32.gmra.mrb[0].mxu0 %v554
    %v624 = vpop.f32.mrb[0].mxu0
    %v625 = vadd.f32 0.0, %v624
    %v626 = vpop.f32.mrb[0].mxu0
    %627 = vdwg.mxu0
    %629 = vrot.lane.b32.xlu0 %v157, 112
    %v630 = vpop.permute.xlu0 %629
    %v631 = vsel %vm168, %v630, 0
    %v633 = vsel %vm168, %v157, 0
    %635 = vmatprep.subr.mxu0 0.0
    %636 = vmatpush1.xpose.msra.mxu0 %v633
    %637 = vmatprep.subr.mxu0 0.0
    %638 = vmatpush1.xpose.msra.mxu0 0.0
    %639 = vmatprep.subr.mxu0 0.0
    %640 = vmatpush1.xpose.msra.mxu0 0.0
    %641 = vmatprep.subr.mxu0 0.0
    %642 = vmatpush1.xpose.msra.mxu0 0.0
    %643 = vmatprep.subr.mxu0 0.0
    %644 = vmatpush1.xpose.msra.mxu0 0.0
    %645 = vmatprep.subr.mxu0 0.0
    %646 = vmatpush1.xpose.msra.mxu0 0.0
    %647 = vmatprep.subr.mxu0 0.0
    %648 = vmatpush1.xpose.msra.mxu0 0.0
    %649 = vmatprep.subr.mxu0 0.0
    %650 = vmatpush1.xpose.msra.mxu0 0.0
    %651 = vmatprep.subr.mxu0 0.0
    %652 = vmatpush1.xpose.msra.mxu0 0.0
    %653 = vmatprep.subr.mxu0 0.0
    %654 = vmatpush1.xpose.msra.mxu0 0.0
    %655 = vmatprep.subr.mxu0 0.0
    %656 = vmatpush1.xpose.msra.mxu0 0.0
    %657 = vmatprep.subr.mxu0 0.0
    %658 = vmatpush1.xpose.msra.mxu0 0.0
    %659 = vmatprep.subr.mxu0 0.0
    %660 = vmatpush1.xpose.msra.mxu0 0.0
    %661 = vmatprep.subr.mxu0 0.0
    %662 = vmatpush1.xpose.msra.mxu0 0.0
    %663 = vmatprep.subr.mxu0 0.0
    %664 = vmatpush1.xpose.msra.mxu0 0.0
    %665 = vmatprep.subr.mxu0 0.0
    %666 = vmatpush1.xpose.msra.mxu0 0.0
    %667 = vmatprep.subr.mxu0 0.0
    %668 = vmatpush1.xpose.msra.mxu0 0.0
    %669 = vmatprep.subr.mxu0 0.0
    %670 = vmatpush1.xpose.msra.mxu0 0.0
    %671 = vmatprep.subr.mxu0 0.0
    %672 = vmatpush1.xpose.msra.mxu0 0.0
    %673 = vmatprep.subr.mxu0 0.0
    %674 = vmatpush1.xpose.msra.mxu0 0.0
    %675 = vmatprep.subr.mxu0 0.0
    %676 = vmatpush1.xpose.msra.mxu0 0.0
    %677 = vmatprep.subr.mxu0 0.0
    %678 = vmatpush1.xpose.msra.mxu0 0.0
    %679 = vmatprep.subr.mxu0 0.0
    %680 = vmatpush1.xpose.msra.mxu0 0.0
    %681 = vmatprep.subr.mxu0 0.0
    %682 = vmatpush1.xpose.msra.mxu0 0.0
    %683 = vmatprep.subr.mxu0 0.0
    %684 = vmatpush1.xpose.msra.mxu0 0.0
    %685 = vmatprep.subr.mxu0 0.0
    %686 = vmatpush1.xpose.msra.mxu0 0.0
    %687 = vmatprep.subr.mxu0 0.0
    %688 = vmatpush1.xpose.msra.mxu0 0.0
    %689 = vmatprep.subr.mxu0 0.0
    %690 = vmatpush1.xpose.msra.mxu0 0.0
    %691 = vmatprep.subr.mxu0 0.0
    %692 = vmatpush1.xpose.msra.mxu0 0.0
    %693 = vmatprep.subr.mxu0 0.0
    %694 = vmatpush1.xpose.msra.mxu0 0.0
    %695 = vmatprep.subr.mxu0 0.0
    %696 = vmatpush1.xpose.msra.mxu0 0.0
    %697 = vmatprep.subr.mxu0 0.0
    %698 = vmatpush1.xpose.msra.mxu0 0.0
    %699 = vmatprep.mubr.f32.mxu0 0.0
    %700 = vmatmul.mubr.f32.gmra.mrb[0].mxu0 %v631
    %v701 = vpop.f32.mrb[0].mxu0
    %v702 = vadd.f32 0.0, %v701
    %v703 = vpop.f32.mrb[0].mxu0
    %704 = vdwg.mxu0
    %706 = vrot.lane.b32.xlu0 %v162, 112
    %v707 = vpop.permute.xlu0 %706
    %v708 = vsel %vm168, %v707, 0
    %v710 = vsel %vm168, %v162, 0
    %712 = vmatprep.subr.mxu0 0.0
    %713 = vmatpush1.xpose.msra.mxu0 %v710
    %714 = vmatprep.subr.mxu0 0.0
    %715 = vmatpush1.xpose.msra.mxu0 0.0
    %716 = vmatprep.subr.mxu0 0.0
    %717 = vmatpush1.xpose.msra.mxu0 0.0
    %718 = vmatprep.subr.mxu0 0.0
    %719 = vmatpush1.xpose.msra.mxu0 0.0
    %720 = vmatprep.subr.mxu0 0.0
    %721 = vmatpush1.xpose.msra.mxu0 0.0
    %722 = vmatprep.subr.mxu0 0.0
    %723 = vmatpush1.xpose.msra.mxu0 0.0
    %724 = vmatprep.subr.mxu0 0.0
    %725 = vmatpush1.xpose.msra.mxu0 0.0
    %726 = vmatprep.subr.mxu0 0.0
    %727 = vmatpush1.xpose.msra.mxu0 0.0
    %728 = vmatprep.subr.mxu0 0.0
    %729 = vmatpush1.xpose.msra.mxu0 0.0
    %730 = vmatprep.subr.mxu0 0.0
    %731 = vmatpush1.xpose.msra.mxu0 0.0
    %732 = vmatprep.subr.mxu0 0.0
    %733 = vmatpush1.xpose.msra.mxu0 0.0
    %734 = vmatprep.subr.mxu0 0.0
    %735 = vmatpush1.xpose.msra.mxu0 0.0
    %736 = vmatprep.subr.mxu0 0.0
    %737 = vmatpush1.xpose.msra.mxu0 0.0
    %738 = vmatprep.subr.mxu0 0.0
    %739 = vmatpush1.xpose.msra.mxu0 0.0
    %740 = vmatprep.subr.mxu0 0.0
    %741 = vmatpush1.xpose.msra.mxu0 0.0
    %742 = vmatprep.subr.mxu0 0.0
    %743 = vmatpush1.xpose.msra.mxu0 0.0
    %744 = vmatprep.subr.mxu0 0.0
    %745 = vmatpush1.xpose.msra.mxu0 0.0
    %746 = vmatprep.subr.mxu0 0.0
    %747 = vmatpush1.xpose.msra.mxu0 0.0
    %748 = vmatprep.subr.mxu0 0.0
    %749 = vmatpush1.xpose.msra.mxu0 0.0
    %750 = vmatprep.subr.mxu0 0.0
    %751 = vmatpush1.xpose.msra.mxu0 0.0
    %752 = vmatprep.subr.mxu0 0.0
    %753 = vmatpush1.xpose.msra.mxu0 0.0
    %754 = vmatprep.subr.mxu0 0.0
    %755 = vmatpush1.xpose.msra.mxu0 0.0
    %756 = vmatprep.subr.mxu0 0.0
    %757 = vmatpush1.xpose.msra.mxu0 0.0
    %758 = vmatprep.subr.mxu0 0.0
    %759 = vmatpush1.xpose.msra.mxu0 0.0
    %760 = vmatprep.subr.mxu0 0.0
    %761 = vmatpush1.xpose.msra.mxu0 0.0
    %762 = vmatprep.subr.mxu0 0.0
    %763 = vmatpush1.xpose.msra.mxu0 0.0
    %764 = vmatprep.subr.mxu0 0.0
    %765 = vmatpush1.xpose.msra.mxu0 0.0
    %766 = vmatprep.subr.mxu0 0.0
    %767 = vmatpush1.xpose.msra.mxu0 0.0
    %768 = vmatprep.subr.mxu0 0.0
    %769 = vmatpush1.xpose.msra.mxu0 0.0
    %770 = vmatprep.subr.mxu0 0.0
    %771 = vmatpush1.xpose.msra.mxu0 0.0
    %772 = vmatprep.subr.mxu0 0.0
    %773 = vmatpush1.xpose.msra.mxu0 0.0
    %774 = vmatprep.subr.mxu0 0.0
    %775 = vmatpush1.xpose.msra.mxu0 0.0
    %776 = vmatprep.mubr.f32.mxu0 0.0
    %777 = vmatmul.mubr.f32.gmra.mrb[0].mxu0 %v708
    %v778 = vpop.f32.mrb[0].mxu0
    %v779 = vadd.f32 0.0, %v778
    %v780 = vpop.f32.mrb[0].mxu0
    %781 = vdwg.mxu0
    %v782 = vsel %vm24, 1, 0
    %vm783 = vcmp.eq.s32.totalorder %v782, 1
    %v784 = vsel %vm783, %v240, -inf
    %v785 = vsel %vm783, %v317, -inf
    %v786 = vsel %vm783, %v394, -inf
    %v787 = vsel %vm783, %v471, -inf
    %v788 = vsel %vm783, %v548, -inf
    %v789 = vsel %vm783, %v625, -inf
    %v790 = vsel %vm783, %v702, -inf
    %v791 = vsel %vm783, %v779, -inf
    %vm792 = vcmask 64512
    %v793 = vsel %vm792, %v784, -inf
    %794 = vmax.xlane.f32.xlu0 %v793
    %v795 = vpop.xlane.xlu0 %794
    %v796 = vsel %vm792, %v785, -inf
    %797 = vmax.xlane.f32.xlu0 %v796
    %v798 = vpop.xlane.xlu0 %797
    %v799 = vsel %vm792, %v786, -inf
    %800 = vmax.xlane.f32.xlu0 %v799
    %v801 = vpop.xlane.xlu0 %800
    %v802 = vsel %vm792, %v787, -inf
    %803 = vmax.xlane.f32.xlu0 %v802
    %v804 = vpop.xlane.xlu0 %803
    %v805 = vsel %vm792, %v788, -inf
    %806 = vmax.xlane.f32.xlu0 %v805
    %v807 = vpop.xlane.xlu0 %806
    %v808 = vsel %vm792, %v789, -inf
    %809 = vmax.xlane.f32.xlu0 %v808
    %v810 = vpop.xlane.xlu0 %809
    %v811 = vsel %vm792, %v790, -inf
    %812 = vmax.xlane.f32.xlu0 %v811
    %v813 = vpop.xlane.xlu0 %812
    %v814 = vsel %vm792, %v791, -inf
    %815 = vmax.xlane.f32.xlu0 %v814
    %v816 = vpop.xlane.xlu0 %815
    %v817 = vsub.f32 %v784, %v795
    %v818 = vsub.f32 %v785, %v798
    %v819 = vsub.f32 %v786, %v801
    %v820 = vsub.f32 %v787, %v804
    %v821 = vsub.f32 %v788, %v807
    %v822 = vsub.f32 %v789, %v810
    %v823 = vsub.f32 %v790, %v813
    %v824 = vsub.f32 %v791, %v816
    %v825 = vmul.f32 %v817, 1.442695
    %v826 = vpow.pop %v825
    %v827 = vmul.f32 %v818, 1.442695
    %v828 = vpow.pop %v827
    %v829 = vmul.f32 %v819, 1.442695
    %v830 = vpow.pop %v829
    %v831 = vmul.f32 %v820, 1.442695
    %v832 = vpow.pop %v831
    %v833 = vmul.f32 %v821, 1.442695
    %v834 = vpow.pop %v833
    %v835 = vmul.f32 %v822, 1.442695
    %v836 = vpow.pop %v835
    %v837 = vmul.f32 %v823, 1.442695
    %v838 = vpow.pop %v837
    %v839 = vmul.f32 %v824, 1.442695
    %v840 = vpow.pop %v839
    %v841 = vsel %vm792, %v826, 0.0
    %842 = vadd.xlane.f32.xlu0 %v841
    %v843 = vpop.xlane.xlu0 %842
    %v844 = vsel %vm792, %v828, 0.0
    %845 = vadd.xlane.f32.xlu0 %v844
    %v846 = vpop.xlane.xlu0 %845
    %v847 = vsel %vm792, %v830, 0.0
    %848 = vadd.xlane.f32.xlu0 %v847
    %v849 = vpop.xlane.xlu0 %848
    %v850 = vsel %vm792, %v832, 0.0
    %851 = vadd.xlane.f32.xlu0 %v850
    %v852 = vpop.xlane.xlu0 %851
    %v853 = vsel %vm792, %v834, 0.0
    %854 = vadd.xlane.f32.xlu0 %v853
    %v855 = vpop.xlane.xlu0 %854
    %v856 = vsel %vm792, %v836, 0.0
    %857 = vadd.xlane.f32.xlu0 %v856
    %v858 = vpop.xlane.xlu0 %857
    %v859 = vsel %vm792, %v838, 0.0
    %860 = vadd.xlane.f32.xlu0 %v859
    %v861 = vpop.xlane.xlu0 %860
    %v862 = vsel %vm792, %v840, 0.0
    %863 = vadd.xlane.f32.xlu0 %v862
    %v864 = vpop.xlane.xlu0 %863
    %v865 = vrcp.pop %v843
    %v866 = vrcp.pop %v846
    %v867 = vrcp.pop %v849
    %v868 = vrcp.pop %v852
    %v869 = vrcp.pop %v855
    %v870 = vrcp.pop %v858
    %v871 = vrcp.pop %v861
    %v872 = vrcp.pop %v864
    %873 = vrot.lane.b32.xlu0 %v127, 96
    %v874 = vpop.permute.xlu0 %873
    %v877 = vsel %vm792, %v826, 0
    %879 = vmatprep.subr.mxu0 0.0
    %880 = vmatpush1.msra.mxu0 %v874
    %881 = vmatprep.subr.mxu0 0.0
    %882 = vmatpush1.msra.mxu0 0.0
    %883 = vmatprep.subr.mxu0 0.0
    %884 = vmatpush1.msra.mxu0 0.0
    %885 = vmatprep.subr.mxu0 0.0
    %886 = vmatpush1.msra.mxu0 0.0
    %887 = vmatprep.subr.mxu0 0.0
    %888 = vmatpush1.msra.mxu0 0.0
    %889 = vmatprep.subr.mxu0 0.0
    %890 = vmatpush1.msra.mxu0 0.0
    %891 = vmatprep.subr.mxu0 0.0
    %892 = vmatpush1.msra.mxu0 0.0
    %893 = vmatprep.subr.mxu0 0.0
    %894 = vmatpush1.msra.mxu0 0.0
    %895 = vmatprep.subr.mxu0 0.0
    %896 = vmatpush1.msra.mxu0 0.0
    %897 = vmatprep.subr.mxu0 0.0
    %898 = vmatpush1.msra.mxu0 0.0
    %899 = vmatprep.subr.mxu0 0.0
    %900 = vmatpush1.msra.mxu0 0.0
    %901 = vmatprep.subr.mxu0 0.0
    %902 = vmatpush1.msra.mxu0 0.0
    %903 = vmatprep.subr.mxu0 0.0
    %904 = vmatpush1.msra.mxu0 0.0
    %905 = vmatprep.subr.mxu0 0.0
    %906 = vmatpush1.msra.mxu0 0.0
    %907 = vmatprep.subr.mxu0 0.0
    %908 = vmatpush1.msra.mxu0 0.0
    %909 = vmatprep.subr.mxu0 0.0
    %910 = vmatpush1.msra.mxu0 0.0
    %911 = vmatprep.subr.mxu0 0.0
    %912 = vmatpush1.msra.mxu0 0.0
    %913 = vmatprep.subr.mxu0 0.0
    %914 = vmatpush1.msra.mxu0 0.0
    %915 = vmatprep.subr.mxu0 0.0
    %916 = vmatpush1.msra.mxu0 0.0
    %917 = vmatprep.subr.mxu0 0.0
    %918 = vmatpush1.msra.mxu0 0.0
    %919 = vmatprep.subr.mxu0 0.0
    %920 = vmatpush1.msra.mxu0 0.0
    %921 = vmatprep.subr.mxu0 0.0
    %922 = vmatpush1.msra.mxu0 0.0
    %923 = vmatprep.subr.mxu0 0.0
    %924 = vmatpush1.msra.mxu0 0.0
    %925 = vmatprep.subr.mxu0 0.0
    %926 = vmatpush1.msra.mxu0 0.0
    %927 = vmatprep.subr.mxu0 0.0
    %928 = vmatpush1.msra.mxu0 0.0
    %929 = vmatprep.subr.mxu0 0.0
    %930 = vmatpush1.msra.mxu0 0.0
    %931 = vmatprep.subr.mxu0 0.0
    %932 = vmatpush1.msra.mxu0 0.0
    %933 = vmatprep.subr.mxu0 0.0
    %934 = vmatpush1.msra.mxu0 0.0
    %935 = vmatprep.subr.mxu0 0.0
    %936 = vmatpush1.msra.mxu0 0.0
    %937 = vmatprep.subr.mxu0 0.0
    %938 = vmatpush1.msra.mxu0 0.0
    %939 = vmatprep.subr.mxu0 0.0
    %940 = vmatpush1.msra.mxu0 0.0
    %941 = vmatprep.subr.mxu0 0.0
    %942 = vmatpush1.msra.mxu0 0.0
    %943 = vmatprep.mubr.f32.mxu0 0.0
    %944 = vmatmul.mubr.f32.gmra.mrb[0].mxu0 %v877
    %v945 = vpop.f32.mrb[0].mxu0
    %v946 = vadd.f32 0.0, %v945
    %v947 = vpop.f32.mrb[0].mxu0
    %948 = vdwg.mxu0
    %949 = vrot.lane.b32.xlu0 %v132, 96
    %v950 = vpop.permute.xlu0 %949
    %v953 = vsel %vm792, %v828, 0
    %955 = vmatprep.subr.mxu0 0.0
    %956 = vmatpush1.msra.mxu0 %v950
    %957 = vmatprep.subr.mxu0 0.0
    %958 = vmatpush1.msra.mxu0 0.0
    %959 = vmatprep.subr.mxu0 0.0
    %960 = vmatpush1.msra.mxu0 0.0
    %961 = vmatprep.subr.mxu0 0.0
    %962 = vmatpush1.msra.mxu0 0.0
    %963 = vmatprep.subr.mxu0 0.0
    %964 = vmatpush1.msra.mxu0 0.0
    %965 = vmatprep.subr.mxu0 0.0
    %966 = vmatpush1.msra.mxu0 0.0
    %967 = vmatprep.subr.mxu0 0.0
    %968 = vmatpush1.msra.mxu0 0.0
    %969 = vmatprep.subr.mxu0 0.0
    %970 = vmatpush1.msra.mxu0 0.0
    %971 = vmatprep.subr.mxu0 0.0
    %972 = vmatpush1.msra.mxu0 0.0
    %973 = vmatprep.subr.mxu0 0.0
    %974 = vmatpush1.msra.mxu0 0.0
    %975 = vmatprep.subr.mxu0 0.0
    %976 = vmatpush1.msra.mxu0 0.0
    %977 = vmatprep.subr.mxu0 0.0
    %978 = vmatpush1.msra.mxu0 0.0
    %979 = vmatprep.subr.mxu0 0.0
    %980 = vmatpush1.msra.mxu0 0.0
    %981 = vmatprep.subr.mxu0 0.0
    %982 = vmatpush1.msra.mxu0 0.0
    %983 = vmatprep.subr.mxu0 0.0
    %984 = vmatpush1.msra.mxu0 0.0
    %985 = vmatprep.subr.mxu0 0.0
    %986 = vmatpush1.msra.mxu0 0.0
    %987 = vmatprep.subr.mxu0 0.0
    %988 = vmatpush1.msra.mxu0 0.0
    %989 = vmatprep.subr.mxu0 0.0
    %990 = vmatpush1.msra.mxu0 0.0
    %991 = vmatprep.subr.mxu0 0.0
    %992 = vmatpush1.msra.mxu0 0.0
    %993 = vmatprep.subr.mxu0 0.0
    %994 = vmatpush1.msra.mxu0 0.0
    %995 = vmatprep.subr.mxu0 0.0
    %996 = vmatpush1.msra.mxu0 0.0
    %997 = vmatprep.subr.mxu0 0.0
    %998 = vmatpush1.msra.mxu0 0.0
    %999 = vmatprep.subr.mxu0 0.0
    %1000 = vmatpush1.msra.mxu0 0.0
    %1001 = vmatprep.subr.mxu0 0.0
    %1002 = vmatpush1.msra.mxu0 0.0
    %1003 = vmatprep.subr.mxu0 0.0
    %1004 = vmatpush1.msra.mxu0 0.0
    %1005 = vmatprep.subr.mxu0 0.0
    %1006 = vmatpush1.msra.mxu0 0.0
    %1007 = vmatprep.subr.mxu0 0.0
    %1008 = vmatpush1.msra.mxu0 0.0
    %1009 = vmatprep.subr.mxu0 0.0
    %1010 = vmatpush1.msra.mxu0 0.0
    %1011 = vmatprep.subr.mxu0 0.0
    %1012 = vmatpush1.msra.mxu0 0.0
    %1013 = vmatprep.subr.mxu0 0.0
    %1014 = vmatpush1.msra.mxu0 0.0
    %1015 = vmatprep.subr.mxu0 0.0
    %1016 = vmatpush1.msra.mxu0 0.0
    %1017 = vmatprep.subr.mxu0 0.0
    %1018 = vmatpush1.msra.mxu0 0.0
    %1019 = vmatprep.mubr.f32.mxu0 0.0
    %1020 = vmatmul.mubr.f32.gmra.mrb[0].mxu0 %v953
    %v1021 = vpop.f32.mrb[0].mxu0
    %v1022 = vadd.f32 0.0, %v1021
    %v1023 = vpop.f32.mrb[0].mxu0
    %1024 = vdwg.mxu0
    %1025 = vrot.lane.b32.xlu0 %v137, 96
    %v1026 = vpop.permute.xlu0 %1025
    %v1029 = vsel %vm792, %v830, 0
    %1031 = vmatprep.subr.mxu0 0.0
    %1032 = vmatpush1.msra.mxu0 %v1026
    %1033 = vmatprep.subr.mxu0 0.0
    %1034 = vmatpush1.msra.mxu0 0.0
    %1035 = vmatprep.subr.mxu0 0.0
    %1036 = vmatpush1.msra.mxu0 0.0
    %1037 = vmatprep.subr.mxu0 0.0
    %1038 = vmatpush1.msra.mxu0 0.0
    %1039 = vmatprep.subr.mxu0 0.0
    %1040 = vmatpush1.msra.mxu0 0.0
    %1041 = vmatprep.subr.mxu0 0.0
    %1042 = vmatpush1.msra.mxu0 0.0
    %1043 = vmatprep.subr.mxu0 0.0
    %1044 = vmatpush1.msra.mxu0 0.0
    %1045 = vmatprep.subr.mxu0 0.0
    %1046 = vmatpush1.msra.mxu0 0.0
    %1047 = vmatprep.subr.mxu0 0.0
    %1048 = vmatpush1.msra.mxu0 0.0
    %1049 = vmatprep.subr.mxu0 0.0
    %1050 = vmatpush1.msra.mxu0 0.0
    %1051 = vmatprep.subr.mxu0 0.0
    %1052 = vmatpush1.msra.mxu0 0.0
    %1053 = vmatprep.subr.mxu0 0.0
    %1054 = vmatpush1.msra.mxu0 0.0
    %1055 = vmatprep.subr.mxu0 0.0
    %1056 = vmatpush1.msra.mxu0 0.0
    %1057 = vmatprep.subr.mxu0 0.0
    %1058 = vmatpush1.msra.mxu0 0.0
    %1059 = vmatprep.subr.mxu0 0.0
    %1060 = vmatpush1.msra.mxu0 0.0
    %1061 = vmatprep.subr.mxu0 0.0
    %1062 = vmatpush1.msra.mxu0 0.0
    %1063 = vmatprep.subr.mxu0 0.0
    %1064 = vmatpush1.msra.mxu0 0.0
    %1065 = vmatprep.subr.mxu0 0.0
    %1066 = vmatpush1.msra.mxu0 0.0
    %1067 = vmatprep.subr.mxu0 0.0
    %1068 = vmatpush1.msra.mxu0 0.0
    %1069 = vmatprep.subr.mxu0 0.0
    %1070 = vmatpush1.msra.mxu0 0.0
    %1071 = vmatprep.subr.mxu0 0.0
    %1072 = vmatpush1.msra.mxu0 0.0
    %1073 = vmatprep.subr.mxu0 0.0
    %1074 = vmatpush1.msra.mxu0 0.0
    %1075 = vmatprep.subr.mxu0 0.0
    %1076 = vmatpush1.msra.mxu0 0.0
    %1077 = vmatprep.subr.mxu0 0.0
    %1078 = vmatpush1.msra.mxu0 0.0
    %1079 = vmatprep.subr.mxu0 0.0
    %1080 = vmatpush1.msra.mxu0 0.0
    %1081 = vmatprep.subr.mxu0 0.0
    %1082 = vmatpush1.msra.mxu0 0.0
    %1083 = vmatprep.subr.mxu0 0.0
    %1084 = vmatpush1.msra.mxu0 0.0
    %1085 = vmatprep.subr.mxu0 0.0
    %1086 = vmatpush1.msra.mxu0 0.0
    %1087 = vmatprep.subr.mxu0 0.0
    %1088 = vmatpush1.msra.mxu0 0.0
    %1089 = vmatprep.subr.mxu0 0.0
    %1090 = vmatpush1.msra.mxu0 0.0
    %1091 = vmatprep.subr.mxu0 0.0
    %1092 = vmatpush1.msra.mxu0 0.0
    %1093 = vmatprep.subr.mxu0 0.0
    %1094 = vmatpush1.msra.mxu0 0.0
    %1095 = vmatprep.mubr.f32.mxu0 0.0
    %1096 = vmatmul.mubr.f32.gmra.mrb[0].mxu0 %v1029
    %v1097 = vpop.f32.mrb[0].mxu0
    %v1098 = vadd.f32 0.0, %v1097
    %v1099 = vpop.f32.mrb[0].mxu0
    %1100 = vdwg.mxu0
    %1101 = vrot.lane.b32.xlu0 %v142, 96
    %v1102 = vpop.permute.xlu0 %1101
    %v1105 = vsel %vm792, %v832, 0
    %1107 = vmatprep.subr.mxu0 0.0
    %1108 = vmatpush1.msra.mxu0 %v1102
    %1109 = vmatprep.subr.mxu0 0.0
    %1110 = vmatpush1.msra.mxu0 0.0
    %1111 = vmatprep.subr.mxu0 0.0
    %1112 = vmatpush1.msra.mxu0 0.0
    %1113 = vmatprep.subr.mxu0 0.0
    %1114 = vmatpush1.msra.mxu0 0.0
    %1115 = vmatprep.subr.mxu0 0.0
    %1116 = vmatpush1.msra.mxu0 0.0
    %1117 = vmatprep.subr.mxu0 0.0
    %1118 = vmatpush1.msra.mxu0 0.0
    %1119 = vmatprep.subr.mxu0 0.0
    %1120 = vmatpush1.msra.mxu0 0.0
    %1121 = vmatprep.subr.mxu0 0.0
    %1122 = vmatpush1.msra.mxu0 0.0
    %1123 = vmatprep.subr.mxu0 0.0
    %1124 = vmatpush1.msra.mxu0 0.0
    %1125 = vmatprep.subr.mxu0 0.0
    %1126 = vmatpush1.msra.mxu0 0.0
    %1127 = vmatprep.subr.mxu0 0.0
    %1128 = vmatpush1.msra.mxu0 0.0
    %1129 = vmatprep.subr.mxu0 0.0
    %1130 = vmatpush1.msra.mxu0 0.0
    %1131 = vmatprep.subr.mxu0 0.0
    %1132 = vmatpush1.msra.mxu0 0.0
    %1133 = vmatprep.subr.mxu0 0.0
    %1134 = vmatpush1.msra.mxu0 0.0
    %1135 = vmatprep.subr.mxu0 0.0
    %1136 = vmatpush1.msra.mxu0 0.0
    %1137 = vmatprep.subr.mxu0 0.0
    %1138 = vmatpush1.msra.mxu0 0.0
    %1139 = vmatprep.subr.mxu0 0.0
    %1140 = vmatpush1.msra.mxu0 0.0
    %1141 = vmatprep.subr.mxu0 0.0
    %1142 = vmatpush1.msra.mxu0 0.0
    %1143 = vmatprep.subr.mxu0 0.0
    %1144 = vmatpush1.msra.mxu0 0.0
    %1145 = vmatprep.subr.mxu0 0.0
    %1146 = vmatpush1.msra.mxu0 0.0
    %1147 = vmatprep.subr.mxu0 0.0
    %1148 = vmatpush1.msra.mxu0 0.0
    %1149 = vmatprep.subr.mxu0 0.0
    %1150 = vmatpush1.msra.mxu0 0.0
    %1151 = vmatprep.subr.mxu0 0.0
    %1152 = vmatpush1.msra.mxu0 0.0
    %1153 = vmatprep.subr.mxu0 0.0
    %1154 = vmatpush1.msra.mxu0 0.0
    %1155 = vmatprep.subr.mxu0 0.0
    %1156 = vmatpush1.msra.mxu0 0.0
    %1157 = vmatprep.subr.mxu0 0.0
    %1158 = vmatpush1.msra.mxu0 0.0
    %1159 = vmatprep.subr.mxu0 0.0
    %1160 = vmatpush1.msra.mxu0 0.0
    %1161 = vmatprep.subr.mxu0 0.0
    %1162 = vmatpush1.msra.mxu0 0.0
    %1163 = vmatprep.subr.mxu0 0.0
    %1164 = vmatpush1.msra.mxu0 0.0
    %1165 = vmatprep.subr.mxu0 0.0
    %1166 = vmatpush1.msra.mxu0 0.0
    %1167 = vmatprep.subr.mxu0 0.0
    %1168 = vmatpush1.msra.mxu0 0.0
    %1169 = vmatprep.subr.mxu0 0.0
    %1170 = vmatpush1.msra.mxu0 0.0
    %1171 = vmatprep.mubr.f32.mxu0 0.0
    %1172 = vmatmul.mubr.f32.gmra.mrb[0].mxu0 %v1105
    %v1173 = vpop.f32.mrb[0].mxu0
    %v1174 = vadd.f32 0.0, %v1173
    %v1175 = vpop.f32.mrb[0].mxu0
    %1176 = vdwg.mxu0
    %1177 = vrot.lane.b32.xlu0 %v147, 96
    %v1178 = vpop.permute.xlu0 %1177
    %v1181 = vsel %vm792, %v834, 0
    %1183 = vmatprep.subr.mxu0 0.0
    %1184 = vmatpush1.msra.mxu0 %v1178
    %1185 = vmatprep.subr.mxu0 0.0
    %1186 = vmatpush1.msra.mxu0 0.0
    %1187 = vmatprep.subr.mxu0 0.0
    %1188 = vmatpush1.msra.mxu0 0.0
    %1189 = vmatprep.subr.mxu0 0.0
    %1190 = vmatpush1.msra.mxu0 0.0
    %1191 = vmatprep.subr.mxu0 0.0
    %1192 = vmatpush1.msra.mxu0 0.0
    %1193 = vmatprep.subr.mxu0 0.0
    %1194 = vmatpush1.msra.mxu0 0.0
    %1195 = vmatprep.subr.mxu0 0.0
    %1196 = vmatpush1.msra.mxu0 0.0
    %1197 = vmatprep.subr.mxu0 0.0
    %1198 = vmatpush1.msra.mxu0 0.0
    %1199 = vmatprep.subr.mxu0 0.0
    %1200 = vmatpush1.msra.mxu0 0.0
    %1201 = vmatprep.subr.mxu0 0.0
    %1202 = vmatpush1.msra.mxu0 0.0
    %1203 = vmatprep.subr.mxu0 0.0
    %1204 = vmatpush1.msra.mxu0 0.0
    %1205 = vmatprep.subr.mxu0 0.0
    %1206 = vmatpush1.msra.mxu0 0.0
    %1207 = vmatprep.subr.mxu0 0.0
    %1208 = vmatpush1.msra.mxu0 0.0
    %1209 = vmatprep.subr.mxu0 0.0
    %1210 = vmatpush1.msra.mxu0 0.0
    %1211 = vmatprep.subr.mxu0 0.0
    %1212 = vmatpush1.msra.mxu0 0.0
    %1213 = vmatprep.subr.mxu0 0.0
    %1214 = vmatpush1.msra.mxu0 0.0
    %1215 = vmatprep.subr.mxu0 0.0
    %1216 = vmatpush1.msra.mxu0 0.0
    %1217 = vmatprep.subr.mxu0 0.0
    %1218 = vmatpush1.msra.mxu0 0.0
    %1219 = vmatprep.subr.mxu0 0.0
    %1220 = vmatpush1.msra.mxu0 0.0
    %1221 = vmatprep.subr.mxu0 0.0
    %1222 = vmatpush1.msra.mxu0 0.0
    %1223 = vmatprep.subr.mxu0 0.0
    %1224 = vmatpush1.msra.mxu0 0.0
    %1225 = vmatprep.subr.mxu0 0.0
    %1226 = vmatpush1.msra.mxu0 0.0
    %1227 = vmatprep.subr.mxu0 0.0
    %1228 = vmatpush1.msra.mxu0 0.0
    %1229 = vmatprep.subr.mxu0 0.0
    %1230 = vmatpush1.msra.mxu0 0.0
    %1231 = vmatprep.subr.mxu0 0.0
    %1232 = vmatpush1.msra.mxu0 0.0
    %1233 = vmatprep.subr.mxu0 0.0
    %1234 = vmatpush1.msra.mxu0 0.0
    %1235 = vmatprep.subr.mxu0 0.0
    %1236 = vmatpush1.msra.mxu0 0.0
    %1237 = vmatprep.subr.mxu0 0.0
    %1238 = vmatpush1.msra.mxu0 0.0
    %1239 = vmatprep.subr.mxu0 0.0
    %1240 = vmatpush1.msra.mxu0 0.0
    %1241 = vmatprep.subr.mxu0 0.0
    %1242 = vmatpush1.msra.mxu0 0.0
    %1243 = vmatprep.subr.mxu0 0.0
    %1244 = vmatpush1.msra.mxu0 0.0
    %1245 = vmatprep.subr.mxu0 0.0
    %1246 = vmatpush1.msra.mxu0 0.0
    %1247 = vmatprep.mubr.f32.mxu0 0.0
    %1248 = vmatmul.mubr.f32.gmra.mrb[0].mxu0 %v1181
    %v1249 = vpop.f32.mrb[0].mxu0
    %v1250 = vadd.f32 0.0, %v1249
    %v1251 = vpop.f32.mrb[0].mxu0
    %1252 = vdwg.mxu0
    %1253 = vrot.lane.b32.xlu0 %v152, 96
    %v1254 = vpop.permute.xlu0 %1253
    %v1257 = vsel %vm792, %v836, 0
    %1259 = vmatprep.subr.mxu0 0.0
    %1260 = vmatpush1.msra.mxu0 %v1254
    %1261 = vmatprep.subr.mxu0 0.0
    %1262 = vmatpush1.msra.mxu0 0.0
    %1263 = vmatprep.subr.mxu0 0.0
    %1264 = vmatpush1.msra.mxu0 0.0
    %1265 = vmatprep.subr.mxu0 0.0
    %1266 = vmatpush1.msra.mxu0 0.0
    %1267 = vmatprep.subr.mxu0 0.0
    %1268 = vmatpush1.msra.mxu0 0.0
    %1269 = vmatprep.subr.mxu0 0.0
    %1270 = vmatpush1.msra.mxu0 0.0
    %1271 = vmatprep.subr.mxu0 0.0
    %1272 = vmatpush1.msra.mxu0 0.0
    %1273 = vmatprep.subr.mxu0 0.0
    %1274 = vmatpush1.msra.mxu0 0.0
    %1275 = vmatprep.subr.mxu0 0.0
    %1276 = vmatpush1.msra.mxu0 0.0
    %1277 = vmatprep.subr.mxu0 0.0
    %1278 = vmatpush1.msra.mxu0 0.0
    %1279 = vmatprep.subr.mxu0 0.0
    %1280 = vmatpush1.msra.mxu0 0.0
    %1281 = vmatprep.subr.mxu0 0.0
    %1282 = vmatpush1.msra.mxu0 0.0
    %1283 = vmatprep.subr.mxu0 0.0
    %1284 = vmatpush1.msra.mxu0 0.0
    %1285 = vmatprep.subr.mxu0 0.0
    %1286 = vmatpush1.msra.mxu0 0.0
    %1287 = vmatprep.subr.mxu0 0.0
    %1288 = vmatpush1.msra.mxu0 0.0
    %1289 = vmatprep.subr.mxu0 0.0
    %1290 = vmatpush1.msra.mxu0 0.0
    %1291 = vmatprep.subr.mxu0 0.0
    %1292 = vmatpush1.msra.mxu0 0.0
    %1293 = vmatprep.subr.mxu0 0.0
    %1294 = vmatpush1.msra.mxu0 0.0
    %1295 = vmatprep.subr.mxu0 0.0
    %1296 = vmatpush1.msra.mxu0 0.0
    %1297 = vmatprep.subr.mxu0 0.0
    %1298 = vmatpush1.msra.mxu0 0.0
    %1299 = vmatprep.subr.mxu0 0.0
    %1300 = vmatpush1.msra.mxu0 0.0
    %1301 = vmatprep.subr.mxu0 0.0
    %1302 = vmatpush1.msra.mxu0 0.0
    %1303 = vmatprep.subr.mxu0 0.0
    %1304 = vmatpush1.msra.mxu0 0.0
    %1305 = vmatprep.subr.mxu0 0.0
    %1306 = vmatpush1.msra.mxu0 0.0
    %1307 = vmatprep.subr.mxu0 0.0
    %1308 = vmatpush1.msra.mxu0 0.0
    %1309 = vmatprep.subr.mxu0 0.0
    %1310 = vmatpush1.msra.mxu0 0.0
    %1311 = vmatprep.subr.mxu0 0.0
    %1312 = vmatpush1.msra.mxu0 0.0
    %1313 = vmatprep.subr.mxu0 0.0
    %1314 = vmatpush1.msra.mxu0 0.0
    %1315 = vmatprep.subr.mxu0 0.0
    %1316 = vmatpush1.msra.mxu0 0.0
    %1317 = vmatprep.subr.mxu0 0.0
    %1318 = vmatpush1.msra.mxu0 0.0
    %1319 = vmatprep.subr.mxu0 0.0
    %1320 = vmatpush1.msra.mxu0 0.0
    %1321 = vmatprep.subr.mxu0 0.0
    %1322 = vmatpush1.msra.mxu0 0.0
    %1323 = vmatprep.mubr.f32.mxu0 0.0
    %1324 = vmatmul.mubr.f32.gmra.mrb[0].mxu0 %v1257
    %v1325 = vpop.f32.mrb[0].mxu0
    %v1326 = vadd.f32 0.0, %v1325
    %v1327 = vpop.f32.mrb[0].mxu0
    %1328 = vdwg.mxu0
    %1329 = vrot.lane.b32.xlu0 %v157, 96
    %v1330 = vpop.permute.xlu0 %1329
    %v1333 = vsel %vm792, %v838, 0
    %1335 = vmatprep.subr.mxu0 0.0
    %1336 = vmatpush1.msra.mxu0 %v1330
    %1337 = vmatprep.subr.mxu0 0.0
    %1338 = vmatpush1.msra.mxu0 0.0
    %1339 = vmatprep.subr.mxu0 0.0
    %1340 = vmatpush1.msra.mxu0 0.0
    %1341 = vmatprep.subr.mxu0 0.0
    %1342 = vmatpush1.msra.mxu0 0.0
    %1343 = vmatprep.subr.mxu0 0.0
    %1344 = vmatpush1.msra.mxu0 0.0
    %1345 = vmatprep.subr.mxu0 0.0
    %1346 = vmatpush1.msra.mxu0 0.0
    %1347 = vmatprep.subr.mxu0 0.0
    %1348 = vmatpush1.msra.mxu0 0.0
    %1349 = vmatprep.subr.mxu0 0.0
    %1350 = vmatpush1.msra.mxu0 0.0
    %1351 = vmatprep.subr.mxu0 0.0
    %1352 = vmatpush1.msra.mxu0 0.0
    %1353 = vmatprep.subr.mxu0 0.0
    %1354 = vmatpush1.msra.mxu0 0.0
    %1355 = vmatprep.subr.mxu0 0.0
    %1356 = vmatpush1.msra.mxu0 0.0
    %1357 = vmatprep.subr.mxu0 0.0
    %1358 = vmatpush1.msra.mxu0 0.0
    %1359 = vmatprep.subr.mxu0 0.0
    %1360 = vmatpush1.msra.mxu0 0.0
    %1361 = vmatprep.subr.mxu0 0.0
    %1362 = vmatpush1.msra.mxu0 0.0
    %1363 = vmatprep.subr.mxu0 0.0
    %1364 = vmatpush1.msra.mxu0 0.0
    %1365 = vmatprep.subr.mxu0 0.0
    %1366 = vmatpush1.msra.mxu0 0.0
    %1367 = vmatprep.subr.mxu0 0.0
    %1368 = vmatpush1.msra.mxu0 0.0
    %1369 = vmatprep.subr.mxu0 0.0
    %1370 = vmatpush1.msra.mxu0 0.0
    %1371 = vmatprep.subr.mxu0 0.0
    %1372 = vmatpush1.msra.mxu0 0.0
    %1373 = vmatprep.subr.mxu0 0.0
    %1374 = vmatpush1.msra.mxu0 0.0
    %1375 = vmatprep.subr.mxu0 0.0
    %1376 = vmatpush1.msra.mxu0 0.0
    %1377 = vmatprep.subr.mxu0 0.0
    %1378 = vmatpush1.msra.mxu0 0.0
    %1379 = vmatprep.subr.mxu0 0.0
    %1380 = vmatpush1.msra.mxu0 0.0
    %1381 = vmatprep.subr.mxu0 0.0
    %1382 = vmatpush1.msra.mxu0 0.0
    %1383 = vmatprep.subr.mxu0 0.0
    %1384 = vmatpush1.msra.mxu0 0.0
    %1385 = vmatprep.subr.mxu0 0.0
    %1386 = vmatpush1.msra.mxu0 0.0
    %1387 = vmatprep.subr.mxu0 0.0
    %1388 = vmatpush1.msra.mxu0 0.0
    %1389 = vmatprep.subr.mxu0 0.0
    %1390 = vmatpush1.msra.mxu0 0.0
    %1391 = vmatprep.subr.mxu0 0.0
    %1392 = vmatpush1.msra.mxu0 0.0
    %1393 = vmatprep.subr.mxu0 0.0
    %1394 = vmatpush1.msra.mxu0 0.0
    %1395 = vmatprep.subr.mxu0 0.0
    %1396 = vmatpush1.msra.mxu0 0.0
    %1397 = vmatprep.subr.mxu0 0.0
    %1398 = vmatpush1.msra.mxu0 0.0
    %1399 = vmatprep.mubr.f32.mxu0 0.0
    %1400 = vmatmul.mubr.f32.gmra.mrb[0].mxu0 %v1333
    %v1401 = vpop.f32.mrb[0].mxu0
    %v1402 = vadd.f32 0.0, %v1401
    %v1403 = vpop.f32.mrb[0].mxu0
    %1404 = vdwg.mxu0
    %1405 = vrot.lane.b32.xlu0 %v162, 96
    %v1406 = vpop.permute.xlu0 %1405
    %v1409 = vsel %vm792, %v840, 0
    %1411 = vmatprep.subr.mxu0 0.0
    %1412 = vmatpush1.msra.mxu0 %v1406
    %1413 = vmatprep.subr.mxu0 0.0
    %1414 = vmatpush1.msra.mxu0 0.0
    %1415 = vmatprep.subr.mxu0 0.0
    %1416 = vmatpush1.msra.mxu0 0.0
    %1417 = vmatprep.subr.mxu0 0.0
    %1418 = vmatpush1.msra.mxu0 0.0
    %1419 = vmatprep.subr.mxu0 0.0
    %1420 = vmatpush1.msra.mxu0 0.0
    %1421 = vmatprep.subr.mxu0 0.0
    %1422 = vmatpush1.msra.mxu0 0.0
    %1423 = vmatprep.subr.mxu0 0.0
    %1424 = vmatpush1.msra.mxu0 0.0
    %1425 = vmatprep.subr.mxu0 0.0
    %1426 = vmatpush1.msra.mxu0 0.0
    %1427 = vmatprep.subr.mxu0 0.0
    %1428 = vmatpush1.msra.mxu0 0.0
    %1429 = vmatprep.subr.mxu0 0.0
    %1430 = vmatpush1.msra.mxu0 0.0
    %1431 = vmatprep.subr.mxu0 0.0
    %1432 = vmatpush1.msra.mxu0 0.0
    %1433 = vmatprep.subr.mxu0 0.0
    %1434 = vmatpush1.msra.mxu0 0.0
    %1435 = vmatprep.subr.mxu0 0.0
    %1436 = vmatpush1.msra.mxu0 0.0
    %1437 = vmatprep.subr.mxu0 0.0
    %1438 = vmatpush1.msra.mxu0 0.0
    %1439 = vmatprep.subr.mxu0 0.0
    %1440 = vmatpush1.msra.mxu0 0.0
    %1441 = vmatprep.subr.mxu0 0.0
    %1442 = vmatpush1.msra.mxu0 0.0
    %1443 = vmatprep.subr.mxu0 0.0
    %1444 = vmatpush1.msra.mxu0 0.0
    %1445 = vmatprep.subr.mxu0 0.0
    %1446 = vmatpush1.msra.mxu0 0.0
    %1447 = vmatprep.subr.mxu0 0.0
    %1448 = vmatpush1.msra.mxu0 0.0
    %1449 = vmatprep.subr.mxu0 0.0
    %1450 = vmatpush1.msra.mxu0 0.0
    %1451 = vmatprep.subr.mxu0 0.0
    %1452 = vmatpush1.msra.mxu0 0.0
    %1453 = vmatprep.subr.mxu0 0.0
    %1454 = vmatpush1.msra.mxu0 0.0
    %1455 = vmatprep.subr.mxu0 0.0
    %1456 = vmatpush1.msra.mxu0 0.0
    %1457 = vmatprep.subr.mxu0 0.0
    %1458 = vmatpush1.msra.mxu0 0.0
    %1459 = vmatprep.subr.mxu0 0.0
    %1460 = vmatpush1.msra.mxu0 0.0
    %1461 = vmatprep.subr.mxu0 0.0
    %1462 = vmatpush1.msra.mxu0 0.0
    %1463 = vmatprep.subr.mxu0 0.0
    %1464 = vmatpush1.msra.mxu0 0.0
    %1465 = vmatprep.subr.mxu0 0.0
    %1466 = vmatpush1.msra.mxu0 0.0
    %1467 = vmatprep.subr.mxu0 0.0
    %1468 = vmatpush1.msra.mxu0 0.0
    %1469 = vmatprep.subr.mxu0 0.0
    %1470 = vmatpush1.msra.mxu0 0.0
    %1471 = vmatprep.subr.mxu0 0.0
    %1472 = vmatpush1.msra.mxu0 0.0
    %1473 = vmatprep.subr.mxu0 0.0
    %1474 = vmatpush1.msra.mxu0 0.0
    %1475 = vmatprep.mubr.f32.mxu0 0.0
    %1476 = vmatmul.mubr.f32.gmra.mrb[0].mxu0 %v1409
    %v1477 = vpop.f32.mrb[0].mxu0
    %v1478 = vadd.f32 0.0, %v1477
    %v1479 = vpop.f32.mrb[0].mxu0
    %1480 = vdwg.mxu0
    %v1481 = vmul.f32 %v946, %v865
    %v1482 = vmul.f32 %v1022, %v866
    %v1483 = vmul.f32 %v1098, %v867
    %v1484 = vmul.f32 %v1174, %v868
    %v1485 = vmul.f32 %v1250, %v869
    %v1486 = vmul.f32 %v1326, %v870
    %v1487 = vmul.f32 %v1402, %v871
    %v1488 = vmul.f32 %v1478, %v872
    %v1489 = vcombine.low %v1481, %v1483
    %v1490 = vcombine.high %v1481, %v1483
    %v1492 = vunpack.c.l.s4 1983009808
    %v1493 = vunpack.c.0.s8 %v1492
    %v1494 = vlaneseq
    %v1495 = vshrl.u32 %v1494, 7
    %v1496 = vsub.s32 %v1493, %v1495
    %v1497 = vrot.slane %v1489, %v1496
    %v1499 = vunpack.c.l.s4 1983009808
    %v1500 = vunpack.c.0.s8 %v1499
    %v1501 = vlaneseq
    %v1502 = vshrl.u32 %v1501, 7
    %v1503 = vsub.s32 %v1500, %v1502
    %v1504 = vrot.slane %v1490, %v1503
    %v1505 = vcombine.low %v1482, %v1484
    %v1506 = vcombine.high %v1482, %v1484
    %v1508 = vunpack.c.l.s4 1983009808
    %v1509 = vunpack.c.0.s8 %v1508
    %v1510 = vlaneseq
    %v1511 = vshrl.u32 %v1510, 7
    %v1512 = vsub.s32 %v1509, %v1511
    %v1513 = vrot.slane %v1505, %v1512
    %v1515 = vunpack.c.l.s4 1983009808
    %v1516 = vunpack.c.0.s8 %v1515
    %v1517 = vlaneseq
    %v1518 = vshrl.u32 %v1517, 7
    %v1519 = vsub.s32 %v1516, %v1518
    %v1520 = vrot.slane %v1506, %v1519
    %v1521 = vcombine.low %v1485, %v1487
    %v1522 = vcombine.high %v1485, %v1487
    %v1524 = vunpack.c.l.s4 1983009808
    %v1525 = vunpack.c.0.s8 %v1524
    %v1526 = vlaneseq
    %v1527 = vshrl.u32 %v1526, 7
    %v1528 = vsub.s32 %v1525, %v1527
    %v1529 = vrot.slane %v1521, %v1528
    %v1531 = vunpack.c.l.s4 1983009808
    %v1532 = vunpack.c.0.s8 %v1531
    %v1533 = vlaneseq
    %v1534 = vshrl.u32 %v1533, 7
    %v1535 = vsub.s32 %v1532, %v1534
    %v1536 = vrot.slane %v1522, %v1535
    %v1537 = vcombine.low %v1486, %v1488
    %v1538 = vcombine.high %v1486, %v1488
    %v1540 = vunpack.c.l.s4 1983009808
    %v1541 = vunpack.c.0.s8 %v1540
    %v1542 = vlaneseq
    %v1543 = vshrl.u32 %v1542, 7
    %v1544 = vsub.s32 %v1541, %v1543
    %v1545 = vrot.slane %v1537, %v1544
    %v1547 = vunpack.c.l.s4 1983009808
    %v1548 = vunpack.c.0.s8 %v1547
    %v1549 = vlaneseq
    %v1550 = vshrl.u32 %v1549, 7
    %v1551 = vsub.s32 %v1548, %v1550
    %v1552 = vrot.slane %v1538, %v1551
    %v1553 = vcombine.low %v1497, %v1513
    %v1554 = vcombine.high %v1497, %v1513
    %v1556 = vunpack.c.l.s4 1934713408
    %v1557 = vunpack.c.0.s8 %v1556
    %v1558 = vlaneseq
    %v1559 = vshrl.u32 %v1558, 7
    %v1560 = vsub.s32 %v1557, %v1559
    %v1561 = vrot.slane %v1553, %v1560
    %v1563 = vunpack.c.l.s4 1934713408
    %v1564 = vunpack.c.0.s8 %v1563
    %v1565 = vlaneseq
    %v1566 = vshrl.u32 %v1565, 7
    %v1567 = vsub.s32 %v1564, %v1566
    %v1568 = vrot.slane %v1554, %v1567
    %v1569 = vcombine.low %v1504, %v1520
    %v1570 = vcombine.high %v1504, %v1520
    %v1572 = vunpack.c.l.s4 1934713408
    %v1573 = vunpack.c.0.s8 %v1572
    %v1574 = vlaneseq
    %v1575 = vshrl.u32 %v1574, 7
    %v1576 = vsub.s32 %v1573, %v1575
    %v1577 = vrot.slane %v1569, %v1576
    %v1579 = vunpack.c.l.s4 1934713408
    %v1580 = vunpack.c.0.s8 %v1579
    %v1581 = vlaneseq
    %v1582 = vshrl.u32 %v1581, 7
    %v1583 = vsub.s32 %v1580, %v1582
    %v1584 = vrot.slane %v1570, %v1583
    %v1585 = vcombine.low %v1529, %v1545
    %v1586 = vcombine.high %v1529, %v1545
    %v1588 = vunpack.c.l.s4 1934713408
    %v1589 = vunpack.c.0.s8 %v1588
    %v1590 = vlaneseq
    %v1591 = vshrl.u32 %v1590, 7
    %v1592 = vsub.s32 %v1589, %v1591
    %v1593 = vrot.slane %v1585, %v1592
    %v1595 = vunpack.c.l.s4 1934713408
    %v1596 = vunpack.c.0.s8 %v1595
    %v1597 = vlaneseq
    %v1598 = vshrl.u32 %v1597, 7
    %v1599 = vsub.s32 %v1596, %v1598
    %v1600 = vrot.slane %v1586, %v1599
    %v1601 = vcombine.low %v1536, %v1552
    %v1602 = vcombine.high %v1536, %v1552
    %v1604 = vunpack.c.l.s4 1934713408
    %v1605 = vunpack.c.0.s8 %v1604
    %v1606 = vlaneseq
    %v1607 = vshrl.u32 %v1606, 7
    %v1608 = vsub.s32 %v1605, %v1607
    %v1609 = vrot.slane %v1601, %v1608
    %v1611 = vunpack.c.l.s4 1934713408
    %v1612 = vunpack.c.0.s8 %v1611
    %v1613 = vlaneseq
    %v1614 = vshrl.u32 %v1613, 7
    %v1615 = vsub.s32 %v1612, %v1614
    %v1616 = vrot.slane %v1602, %v1615
    %v1617 = vcombine.low %v1561, %v1593
    %v1618 = vcombine.high %v1561, %v1593
    %v1619 = vcombine.low %v1568, %v1600
    %v1620 = vcombine.high %v1568, %v1600
    %v1621 = vcombine.low %v1577, %v1609
    %v1622 = vcombine.high %v1577, %v1609
    %v1623 = vcombine.low %v1584, %v1616
    %v1624 = vcombine.high %v1584, %v1616
    %1626 = vrot.lane.b32.xlu0 %v1618, 16
    %v1627 = vpop.permute.xlu0 %1626
    %1630 = vrot.lane.b32.xlu0 %v1619, 32
    %v1631 = vpop.permute.xlu0 %1630
    %1634 = vrot.lane.b32.xlu0 %v1620, 48
    %v1635 = vpop.permute.xlu0 %1634
    %1638 = vrot.lane.b32.xlu0 %v1621, 64
    %v1639 = vpop.permute.xlu0 %1638
    %1642 = vrot.lane.b32.xlu0 %v1622, 80
    %v1643 = vpop.permute.xlu0 %1642
    %1646 = vrot.lane.b32.xlu0 %v1623, 96
    %v1647 = vpop.permute.xlu0 %1646
    %1650 = vrot.lane.b32.xlu0 %v1624, 112
    %v1651 = vpop.permute.xlu0 %1650
    %v1653 = vsel %vm168, %v1617, %v1627
    %vm1654 = vcmask 261120
    %v1655 = vsel %vm1654, %v1653, %v1631
    %vm1656 = vcmask 392192
    %v1657 = vsel %vm1656, %v1655, %v1635
    %v1658 = vsel %vm35, %v1657, %v1639
    %vm1659 = vcmask 654336
    %v1660 = vsel %vm1659, %v1658, %v1643
    %vm1661 = vcmask 785408
    %v1662 = vsel %vm1661, %v1660, %v1647
    %vm1663 = vcmask 916480
    %v1664 = vsel %vm1663, %v1662, %v1651
    %1665 = vst [vmem:[#allocation2] sm:$0xff] %v1664
    // Predicated region
    $region10: #{tpu_custom_call.1} parent=1 // pred_check
      _
    $region11: #{tpu_custom_call.1} parent=1 // pred_check_branch
      %1667 = sbr.rel (0) target = $region13
    $region12: #{tpu_custom_call.1} parent=1 // pred_region
      %s1669 = ssub.s32 128, 128
      %1670 = vsyncadd [#allocation3], %s1669
      %s1672 = sshll.u32 [#allocation2], 4
      %s1673 = int_to_ptr.vmem [resolvable:$true] %s1672
      %1675 = dma.vmem_to_hbm [thread:$0]  %s1673, 128, %s2, [#allocation3]
    $region13: #{tpu_custom_call.1} parent=1 // pred_fallthru
      _
    // Predicated region
    $region14: #{tpu_custom_call.1} parent=1 // pred_check
      _
    $region15: #{tpu_custom_call.1} parent=1 // pred_check_branch
      %1677 = sbr.rel (0) target = $region17
    $region16: #{tpu_custom_call.1} parent=1 // pred_region
      %1678 = dma.done [#allocation3], 128
    $region17: #{tpu_custom_call.1} parent=1 // pred_fallthru
      _
    %1679 = vsyncpa [#allocation3], 1

</llo_original>
